<compile_context>
chip_gen: v5e
topology: v5e:2x2
jax: 0.10.0
libtpu: 0.0.40
codegen_flags: <defaults>
</compile_context>

<pallas_src>
import jax
import jax.numpy as jnp
from jax.experimental import pallas as pl
from jax.experimental.pallas import tpu as pltpu


def taxi_lstm_kernel(x_ref, wih_ref, whh_ref, bias_ref, wfc_ref, bfc_ref, out_ref):
    """Fused LSTM forward + final FC, single invocation.

    x_ref   : (T, B, D)   time-major input
    wih_ref : (4, D, H)   per-gate input weights (i, f, g, o), pre-transposed
    whh_ref : (4, H, H)   per-gate recurrent weights, pre-transposed
    bias_ref: (4, 1, H)   per-gate combined bias (b_ih + b_hh)
    wfc_ref : (H, O)      FC weight, pre-transposed
    bfc_ref : (1, O)      FC bias
    out_ref : (B, O)      fc(h_T)
    """
    T, B, D = x_ref.shape
    H = whh_ref.shape[1]

    # Hoist all weight / bias loads out of the recurrence.
    wih_i, wih_f, wih_g, wih_o = wih_ref[0], wih_ref[1], wih_ref[2], wih_ref[3]
    whh_i, whh_f, whh_g, whh_o = whh_ref[0], whh_ref[1], whh_ref[2], whh_ref[3]
    b_i, b_f, b_g, b_o = bias_ref[0], bias_ref[1], bias_ref[2], bias_ref[3]

    def step(t, carry):
        h, c = carry
        x_t = x_ref[t]                                           # (B, D)
        # Gates are natively (B, H): no lane slicing on the serial chain.
        # The x_t dots don't depend on h, so the unrolled scheduler overlaps
        # them with the previous step's EUP/VPU work.
        pre_i = (jnp.dot(x_t, wih_i, preferred_element_type=jnp.float32)
                 + jnp.dot(h, whh_i, preferred_element_type=jnp.float32) + b_i)
        pre_f = (jnp.dot(x_t, wih_f, preferred_element_type=jnp.float32)
                 + jnp.dot(h, whh_f, preferred_element_type=jnp.float32) + b_f)
        pre_g = (jnp.dot(x_t, wih_g, preferred_element_type=jnp.float32)
                 + jnp.dot(h, whh_g, preferred_element_type=jnp.float32) + b_g)
        pre_o = (jnp.dot(x_t, wih_o, preferred_element_type=jnp.float32)
                 + jnp.dot(h, whh_o, preferred_element_type=jnp.float32) + b_o)
        i_g = jax.nn.sigmoid(pre_i)
        f_g = jax.nn.sigmoid(pre_f)
        g_g = jnp.tanh(pre_g)
        o_g = jax.nn.sigmoid(pre_o)
        c_new = f_g * c + i_g * g_g
        h_new = o_g * jnp.tanh(c_new)
        return (h_new, c_new)

    h0 = jnp.zeros((B, H), jnp.float32)
    c0 = jnp.zeros((B, H), jnp.float32)
    # Full unroll while T is small (scheduler sees the whole serial chain);
    # bounded unroll for long sequences to avoid code-size / vreg-spill blowup.
    unroll = True if T <= 32 else 8
    h_T, _ = jax.lax.fori_loop(0, T, step, (h0, c0), unroll=unroll)

    # Fused final FC: (B, H) @ (H, O) + bias.  The O=4 masked store runs once.
    out_ref[...] = (jnp.dot(h_T, wfc_ref[...], preferred_element_type=jnp.float32)
                    + bfc_ref[...]).astype(out_ref.dtype)


@jax.jit
def taxi_driver_lstm(x, w_ih, w_hh, b_ih, b_hh, w_fc, b_fc):
    """x: (B, T, D) batch_first; params in PyTorch nn.LSTM / nn.Linear shapes.
    Returns (B, output_dim) == fc(lstm(x)[0][:, -1, :])."""
    B, T, D = x.shape
    H = w_hh.shape[1]
    O = w_fc.shape[0]
    f32 = jnp.float32

    # Tiny layout prep, all fused under jit (x is only B*T*D*4 bytes):
    x_tm = jnp.transpose(x.astype(f32), (1, 0, 2))                        # (T, B, D)
    wih_g = jnp.transpose(w_ih.astype(f32).reshape(4, H, D), (0, 2, 1))   # (4, D, H)
    whh_g = jnp.transpose(w_hh.astype(f32).reshape(4, H, H), (0, 2, 1))   # (4, H, H)
    bias_g = (b_ih + b_hh).astype(f32).reshape(4, 1, H)                   # (4, 1, H)
    wfc_t = jnp.transpose(w_fc.astype(f32))                               # (H, O)
    bfc = b_fc.astype(f32).reshape(1, O)                                  # (1, O)

    return pl.pallas_call(
        taxi_lstm_kernel,
        out_shape=jax.ShapeDtypeStruct((B, O), f32),
        in_specs=[pl.BlockSpec(memory_space=pltpu.MemorySpace.VMEM)] * 6,
        out_specs=pl.BlockSpec(memory_space=pltpu.MemorySpace.VMEM),
    )(x_tm, wih_g, whh_g, bias_g, wfc_t, bfc)


def reference_jax(x, w_ih, w_hh, b_ih, b_hh, w_fc, b_fc):
    B, T, D = x.shape
    H = w_hh.shape[1]

    def step(carry, x_t):
        h, c = carry
        gates = x_t @ w_ih.T + h @ w_hh.T + b_ih + b_hh
        i_g = jax.nn.sigmoid(gates[:, 0 * H:1 * H])
        f_g = jax.nn.sigmoid(gates[:, 1 * H:2 * H])
        g_g = jnp.tanh(gates[:, 2 * H:3 * H])
        o_g = jax.nn.sigmoid(gates[:, 3 * H:4 * H])
        c_new = f_g * c + i_g * g_g
        h_new = o_g * jnp.tanh(c_new)
        return (h_new, c_new), None

    h0 = jnp.zeros((B, H), jnp.float32)
    c0 = jnp.zeros((B, H), jnp.float32)
    (h_T, _), _ = jax.lax.scan(step, (h0, c0), jnp.transpose(x, (1, 0, 2)))
    return h_T @ w_fc.T + b_fc


if __name__ == "__main__":
    # Small shapes consistent with the module's forward.
    B, T, D, H, O = 2, 8, 4, 32, 4

    key = jax.random.PRNGKey(0)
    ks = jax.random.split(key, 7)
    scale = 1.0 / jnp.sqrt(H)
    w_ih = jax.random.uniform(ks[0], (4 * H, D), jnp.float32, -scale, scale)
    w_hh = jax.random.uniform(ks[1], (4 * H, H), jnp.float32, -scale, scale)
    b_ih = jax.random.uniform(ks[2], (4 * H,), jnp.float32, -scale, scale)
    b_hh = jax.random.uniform(ks[3], (4 * H,), jnp.float32, -scale, scale)
    w_fc = jax.random.uniform(ks[4], (O, H), jnp.float32, -scale, scale)
    b_fc = jax.random.uniform(ks[5], (O,), jnp.float32, -scale, scale)
    x = jax.random.normal(ks[6], (B, T, D), jnp.float32)

    out = taxi_driver_lstm(x, w_ih, w_hh, b_ih, b_hh, w_fc, b_fc)
    out = jax.block_until_ready(out)

    ref = reference_jax(x, w_ih, w_hh, b_ih, b_hh, w_fc, b_fc)
    assert out.shape == (B, O)
    assert jnp.allclose(out, ref, atol=1e-5, rtol=1e-5), "mismatch vs reference"

    print("KERNEL_OK")
</pallas_src>

<mosaic_0001>
module attributes {stable_mosaic.version = 11 : i64} {
  func.func @taxi_lstm_kernel(%arg0: memref<8x2x4xf32, #tpu.memory_space<vmem>>, %arg1: memref<4x4x32xf32, #tpu.memory_space<vmem>>, %arg2: memref<4x32x32xf32, #tpu.memory_space<vmem>>, %arg3: memref<4x1x32xf32, #tpu.memory_space<vmem>>, %arg4: memref<32x4xf32, #tpu.memory_space<vmem>>, %arg5: memref<1x4xf32, #tpu.memory_space<vmem>>, %arg6: memref<2x4xf32, #tpu.memory_space<vmem>>) attributes {dimension_semantics = [], scalar_prefetch = 0 : i64, scratch_operands = 0 : i64, tpu.core_type = #tpu.core_type<tc>} {
    %c0 = arith.constant 0 : index
    %c0_0 = arith.constant 0 : index
    %c0_1 = arith.constant 0 : index
    %0 = vector.load %arg1[%c0, %c0_0, %c0_1] : memref<4x4x32xf32, #tpu.memory_space<vmem>>, vector<1x4x32xf32>
    %1 = vector.shape_cast %0 : vector<1x4x32xf32> to vector<4x32xf32>
    %c1 = arith.constant 1 : index
    %c0_2 = arith.constant 0 : index
    %c0_3 = arith.constant 0 : index
    %2 = vector.load %arg1[%c1, %c0_2, %c0_3] : memref<4x4x32xf32, #tpu.memory_space<vmem>>, vector<1x4x32xf32>
    %3 = vector.shape_cast %2 : vector<1x4x32xf32> to vector<4x32xf32>
    %c2 = arith.constant 2 : index
    %c0_4 = arith.constant 0 : index
    %c0_5 = arith.constant 0 : index
    %4 = vector.load %arg1[%c2, %c0_4, %c0_5] : memref<4x4x32xf32, #tpu.memory_space<vmem>>, vector<1x4x32xf32>
    %5 = vector.shape_cast %4 : vector<1x4x32xf32> to vector<4x32xf32>
    %c3 = arith.constant 3 : index
    %c0_6 = arith.constant 0 : index
    %c0_7 = arith.constant 0 : index
    %6 = vector.load %arg1[%c3, %c0_6, %c0_7] : memref<4x4x32xf32, #tpu.memory_space<vmem>>, vector<1x4x32xf32>
    %7 = vector.shape_cast %6 : vector<1x4x32xf32> to vector<4x32xf32>
    %c0_8 = arith.constant 0 : index
    %c0_9 = arith.constant 0 : index
    %c0_10 = arith.constant 0 : index
    %8 = vector.load %arg2[%c0_8, %c0_9, %c0_10] : memref<4x32x32xf32, #tpu.memory_space<vmem>>, vector<1x32x32xf32>
    %9 = vector.shape_cast %8 : vector<1x32x32xf32> to vector<32x32xf32>
    %c1_11 = arith.constant 1 : index
    %c0_12 = arith.constant 0 : index
    %c0_13 = arith.constant 0 : index
    %10 = vector.load %arg2[%c1_11, %c0_12, %c0_13] : memref<4x32x32xf32, #tpu.memory_space<vmem>>, vector<1x32x32xf32>
    %11 = vector.shape_cast %10 : vector<1x32x32xf32> to vector<32x32xf32>
    %c2_14 = arith.constant 2 : index
    %c0_15 = arith.constant 0 : index
    %c0_16 = arith.constant 0 : index
    %12 = vector.load %arg2[%c2_14, %c0_15, %c0_16] : memref<4x32x32xf32, #tpu.memory_space<vmem>>, vector<1x32x32xf32>
    %13 = vector.shape_cast %12 : vector<1x32x32xf32> to vector<32x32xf32>
    %c3_17 = arith.constant 3 : index
    %c0_18 = arith.constant 0 : index
    %c0_19 = arith.constant 0 : index
    %14 = vector.load %arg2[%c3_17, %c0_18, %c0_19] : memref<4x32x32xf32, #tpu.memory_space<vmem>>, vector<1x32x32xf32>
    %15 = vector.shape_cast %14 : vector<1x32x32xf32> to vector<32x32xf32>
    %c0_20 = arith.constant 0 : index
    %c0_21 = arith.constant 0 : index
    %c0_22 = arith.constant 0 : index
    %16 = vector.load %arg3[%c0_20, %c0_21, %c0_22] : memref<4x1x32xf32, #tpu.memory_space<vmem>>, vector<1x1x32xf32>
    %17 = vector.shape_cast %16 : vector<1x1x32xf32> to vector<1x32xf32>
    %c1_23 = arith.constant 1 : index
    %c0_24 = arith.constant 0 : index
    %c0_25 = arith.constant 0 : index
    %18 = vector.load %arg3[%c1_23, %c0_24, %c0_25] : memref<4x1x32xf32, #tpu.memory_space<vmem>>, vector<1x1x32xf32>
    %19 = vector.shape_cast %18 : vector<1x1x32xf32> to vector<1x32xf32>
    %c2_26 = arith.constant 2 : index
    %c0_27 = arith.constant 0 : index
    %c0_28 = arith.constant 0 : index
    %20 = vector.load %arg3[%c2_26, %c0_27, %c0_28] : memref<4x1x32xf32, #tpu.memory_space<vmem>>, vector<1x1x32xf32>
    %21 = vector.shape_cast %20 : vector<1x1x32xf32> to vector<1x32xf32>
    %c3_29 = arith.constant 3 : index
    %c0_30 = arith.constant 0 : index
    %c0_31 = arith.constant 0 : index
    %22 = vector.load %arg3[%c3_29, %c0_30, %c0_31] : memref<4x1x32xf32, #tpu.memory_space<vmem>>, vector<1x1x32xf32>
    %23 = vector.shape_cast %22 : vector<1x1x32xf32> to vector<1x32xf32>
    %cst = arith.constant 0.000000e+00 : f32
    %24 = vector.broadcast %cst : f32 to vector<2x32xf32>
    %cst_32 = arith.constant 0.000000e+00 : f32
    %25 = vector.broadcast %cst_32 : f32 to vector<2x32xf32>
    %c0_i32 = arith.constant 0 : i32
    %26 = arith.index_cast %c0_i32 : i32 to index
    %c0_33 = arith.constant 0 : index
    %c0_34 = arith.constant 0 : index
    %27 = vector.load %arg0[%26, %c0_33, %c0_34] : memref<8x2x4xf32, #tpu.memory_space<vmem>>, vector<1x2x4xf32>
    %28 = vector.shape_cast %27 : vector<1x2x4xf32> to vector<2x4xf32>
    %cst_35 = arith.constant dense<0.000000e+00> : vector<2x32xf32>
    %29 = tpu.matmul %28, %1, %cst_35 {dimension_numbers = #tpu.dot_dimension_numbers<[1], [0], [0], [1], [0, 0, 1, 1], [], []>} : vector<2x4xf32>, vector<4x32xf32>, vector<2x32xf32> -> vector<2x32xf32>
    %cst_36 = arith.constant dense<0.000000e+00> : vector<2x32xf32>
    %30 = tpu.matmul %24, %9, %cst_36 {dimension_numbers = #tpu.dot_dimension_numbers<[1], [0], [0], [1], [0, 0, 1, 1], [], []>} : vector<2x32xf32>, vector<32x32xf32>, vector<2x32xf32> -> vector<2x32xf32>
    %31 = arith.addf %29, %30 : vector<2x32xf32>
    %32 = vector.broadcast %17 : vector<1x32xf32> to vector<2x32xf32>
    %33 = arith.addf %31, %32 : vector<2x32xf32>
    %cst_37 = arith.constant dense<0.000000e+00> : vector<2x32xf32>
    %34 = tpu.matmul %28, %3, %cst_37 {dimension_numbers = #tpu.dot_dimension_numbers<[1], [0], [0], [1], [0, 0, 1, 1], [], []>} : vector<2x4xf32>, vector<4x32xf32>, vector<2x32xf32> -> vector<2x32xf32>
    %cst_38 = arith.constant dense<0.000000e+00> : vector<2x32xf32>
    %35 = tpu.matmul %24, %11, %cst_38 {dimension_numbers = #tpu.dot_dimension_numbers<[1], [0], [0], [1], [0, 0, 1, 1], [], []>} : vector<2x32xf32>, vector<32x32xf32>, vector<2x32xf32> -> vector<2x32xf32>
    %36 = arith.addf %34, %35 : vector<2x32xf32>
    %37 = vector.broadcast %19 : vector<1x32xf32> to vector<2x32xf32>
    %38 = arith.addf %36, %37 : vector<2x32xf32>
    %cst_39 = arith.constant dense<0.000000e+00> : vector<2x32xf32>
    %39 = tpu.matmul %28, %5, %cst_39 {dimension_numbers = #tpu.dot_dimension_numbers<[1], [0], [0], [1], [0, 0, 1, 1], [], []>} : vector<2x4xf32>, vector<4x32xf32>, vector<2x32xf32> -> vector<2x32xf32>
    %cst_40 = arith.constant dense<0.000000e+00> : vector<2x32xf32>
    %40 = tpu.matmul %24, %13, %cst_40 {dimension_numbers = #tpu.dot_dimension_numbers<[1], [0], [0], [1], [0, 0, 1, 1], [], []>} : vector<2x32xf32>, vector<32x32xf32>, vector<2x32xf32> -> vector<2x32xf32>
    %41 = arith.addf %39, %40 : vector<2x32xf32>
    %42 = vector.broadcast %21 : vector<1x32xf32> to vector<2x32xf32>
    %43 = arith.addf %41, %42 : vector<2x32xf32>
    %cst_41 = arith.constant dense<0.000000e+00> : vector<2x32xf32>
    %44 = tpu.matmul %28, %7, %cst_41 {dimension_numbers = #tpu.dot_dimension_numbers<[1], [0], [0], [1], [0, 0, 1, 1], [], []>} : vector<2x4xf32>, vector<4x32xf32>, vector<2x32xf32> -> vector<2x32xf32>
    %cst_42 = arith.constant dense<0.000000e+00> : vector<2x32xf32>
    %45 = tpu.matmul %24, %15, %cst_42 {dimension_numbers = #tpu.dot_dimension_numbers<[1], [0], [0], [1], [0, 0, 1, 1], [], []>} : vector<2x32xf32>, vector<32x32xf32>, vector<2x32xf32> -> vector<2x32xf32>
    %46 = arith.addf %44, %45 : vector<2x32xf32>
    %47 = vector.broadcast %23 : vector<1x32xf32> to vector<2x32xf32>
    %48 = arith.addf %46, %47 : vector<2x32xf32>
    %49 = arith.negf %33 : vector<2x32xf32>
    %50 = math.exp %49 : vector<2x32xf32>
    %cst_43 = arith.constant 1.000000e+00 : f32
    %51 = vector.broadcast %cst_43 : f32 to vector<2x32xf32>
    %52 = arith.addf %51, %50 : vector<2x32xf32>
    %53 = arith.divf %51, %52 : vector<2x32xf32>
    %54 = arith.negf %38 : vector<2x32xf32>
    %55 = math.exp %54 : vector<2x32xf32>
    %cst_44 = arith.constant 1.000000e+00 : f32
    %56 = vector.broadcast %cst_44 : f32 to vector<2x32xf32>
    %57 = arith.addf %56, %55 : vector<2x32xf32>
    %58 = arith.divf %56, %57 : vector<2x32xf32>
    %59 = math.tanh %43 : vector<2x32xf32>
    %60 = arith.negf %48 : vector<2x32xf32>
    %61 = math.exp %60 : vector<2x32xf32>
    %cst_45 = arith.constant 1.000000e+00 : f32
    %62 = vector.broadcast %cst_45 : f32 to vector<2x32xf32>
    %63 = arith.addf %62, %61 : vector<2x32xf32>
    %64 = arith.divf %62, %63 : vector<2x32xf32>
    %65 = arith.mulf %58, %25 : vector<2x32xf32>
    %66 = arith.mulf %53, %59 : vector<2x32xf32>
    %67 = arith.addf %65, %66 : vector<2x32xf32>
    %68 = math.tanh %67 : vector<2x32xf32>
    %69 = arith.mulf %64, %68 : vector<2x32xf32>
    %c1_i32 = arith.constant 1 : i32
    %70 = arith.index_cast %c1_i32 : i32 to index
    %c0_46 = arith.constant 0 : index
    %c0_47 = arith.constant 0 : index
    %71 = vector.load %arg0[%70, %c0_46, %c0_47] : memref<8x2x4xf32, #tpu.memory_space<vmem>>, vector<1x2x4xf32>
    %72 = vector.shape_cast %71 : vector<1x2x4xf32> to vector<2x4xf32>
    %cst_48 = arith.constant dense<0.000000e+00> : vector<2x32xf32>
    %73 = tpu.matmul %72, %1, %cst_48 {dimension_numbers = #tpu.dot_dimension_numbers<[1], [0], [0], [1], [0, 0, 1, 1], [], []>} : vector<2x4xf32>, vector<4x32xf32>, vector<2x32xf32> -> vector<2x32xf32>
    %cst_49 = arith.constant dense<0.000000e+00> : vector<2x32xf32>
    %74 = tpu.matmul %69, %9, %cst_49 {dimension_numbers = #tpu.dot_dimension_numbers<[1], [0], [0], [1], [0, 0, 1, 1], [], []>} : vector<2x32xf32>, vector<32x32xf32>, vector<2x32xf32> -> vector<2x32xf32>
    %75 = arith.addf %73, %74 : vector<2x32xf32>
    %76 = vector.broadcast %17 : vector<1x32xf32> to vector<2x32xf32>
    %77 = arith.addf %75, %76 : vector<2x32xf32>
    %cst_50 = arith.constant dense<0.000000e+00> : vector<2x32xf32>
    %78 = tpu.matmul %72, %3, %cst_50 {dimension_numbers = #tpu.dot_dimension_numbers<[1], [0], [0], [1], [0, 0, 1, 1], [], []>} : vector<2x4xf32>, vector<4x32xf32>, vector<2x32xf32> -> vector<2x32xf32>
    %cst_51 = arith.constant dense<0.000000e+00> : vector<2x32xf32>
    %79 = tpu.matmul %69, %11, %cst_51 {dimension_numbers = #tpu.dot_dimension_numbers<[1], [0], [0], [1], [0, 0, 1, 1], [], []>} : vector<2x32xf32>, vector<32x32xf32>, vector<2x32xf32> -> vector<2x32xf32>
    %80 = arith.addf %78, %79 : vector<2x32xf32>
    %81 = vector.broadcast %19 : vector<1x32xf32> to vector<2x32xf32>
    %82 = arith.addf %80, %81 : vector<2x32xf32>
    %cst_52 = arith.constant dense<0.000000e+00> : vector<2x32xf32>
    %83 = tpu.matmul %72, %5, %cst_52 {dimension_numbers = #tpu.dot_dimension_numbers<[1], [0], [0], [1], [0, 0, 1, 1], [], []>} : vector<2x4xf32>, vector<4x32xf32>, vector<2x32xf32> -> vector<2x32xf32>
    %cst_53 = arith.constant dense<0.000000e+00> : vector<2x32xf32>
    %84 = tpu.matmul %69, %13, %cst_53 {dimension_numbers = #tpu.dot_dimension_numbers<[1], [0], [0], [1], [0, 0, 1, 1], [], []>} : vector<2x32xf32>, vector<32x32xf32>, vector<2x32xf32> -> vector<2x32xf32>
    %85 = arith.addf %83, %84 : vector<2x32xf32>
    %86 = vector.broadcast %21 : vector<1x32xf32> to vector<2x32xf32>
    %87 = arith.addf %85, %86 : vector<2x32xf32>
    %cst_54 = arith.constant dense<0.000000e+00> : vector<2x32xf32>
    %88 = tpu.matmul %72, %7, %cst_54 {dimension_numbers = #tpu.dot_dimension_numbers<[1], [0], [0], [1], [0, 0, 1, 1], [], []>} : vector<2x4xf32>, vector<4x32xf32>, vector<2x32xf32> -> vector<2x32xf32>
    %cst_55 = arith.constant dense<0.000000e+00> : vector<2x32xf32>
    %89 = tpu.matmul %69, %15, %cst_55 {dimension_numbers = #tpu.dot_dimension_numbers<[1], [0], [0], [1], [0, 0, 1, 1], [], []>} : vector<2x32xf32>, vector<32x32xf32>, vector<2x32xf32> -> vector<2x32xf32>
    %90 = arith.addf %88, %89 : vector<2x32xf32>
    %91 = vector.broadcast %23 : vector<1x32xf32> to vector<2x32xf32>
    %92 = arith.addf %90, %91 : vector<2x32xf32>
    %93 = arith.negf %77 : vector<2x32xf32>
    %94 = math.exp %93 : vector<2x32xf32>
    %cst_56 = arith.constant 1.000000e+00 : f32
    %95 = vector.broadcast %cst_56 : f32 to vector<2x32xf32>
    %96 = arith.addf %95, %94 : vector<2x32xf32>
    %97 = arith.divf %95, %96 : vector<2x32xf32>
    %98 = arith.negf %82 : vector<2x32xf32>
    %99 = math.exp %98 : vector<2x32xf32>
    %cst_57 = arith.constant 1.000000e+00 : f32
    %100 = vector.broadcast %cst_57 : f32 to vector<2x32xf32>
    %101 = arith.addf %100, %99 : vector<2x32xf32>
    %102 = arith.divf %100, %101 : vector<2x32xf32>
    %103 = math.tanh %87 : vector<2x32xf32>
    %104 = arith.negf %92 : vector<2x32xf32>
    %105 = math.exp %104 : vector<2x32xf32>
    %cst_58 = arith.constant 1.000000e+00 : f32
    %106 = vector.broadcast %cst_58 : f32 to vector<2x32xf32>
    %107 = arith.addf %106, %105 : vector<2x32xf32>
    %108 = arith.divf %106, %107 : vector<2x32xf32>
    %109 = arith.mulf %102, %67 : vector<2x32xf32>
    %110 = arith.mulf %97, %103 : vector<2x32xf32>
    %111 = arith.addf %109, %110 : vector<2x32xf32>
    %112 = math.tanh %111 : vector<2x32xf32>
    %113 = arith.mulf %108, %112 : vector<2x32xf32>
    %c2_i32 = arith.constant 2 : i32
    %114 = arith.index_cast %c2_i32 : i32 to index
    %c0_59 = arith.constant 0 : index
    %c0_60 = arith.constant 0 : index
    %115 = vector.load %arg0[%114, %c0_59, %c0_60] : memref<8x2x4xf32, #tpu.memory_space<vmem>>, vector<1x2x4xf32>
    %116 = vector.shape_cast %115 : vector<1x2x4xf32> to vector<2x4xf32>
    %cst_61 = arith.constant dense<0.000000e+00> : vector<2x32xf32>
    %117 = tpu.matmul %116, %1, %cst_61 {dimension_numbers = #tpu.dot_dimension_numbers<[1], [0], [0], [1], [0, 0, 1, 1], [], []>} : vector<2x4xf32>, vector<4x32xf32>, vector<2x32xf32> -> vector<2x32xf32>
    %cst_62 = arith.constant dense<0.000000e+00> : vector<2x32xf32>
    %118 = tpu.matmul %113, %9, %cst_62 {dimension_numbers = #tpu.dot_dimension_numbers<[1], [0], [0], [1], [0, 0, 1, 1], [], []>} : vector<2x32xf32>, vector<32x32xf32>, vector<2x32xf32> -> vector<2x32xf32>
    %119 = arith.addf %117, %118 : vector<2x32xf32>
    %120 = vector.broadcast %17 : vector<1x32xf32> to vector<2x32xf32>
    %121 = arith.addf %119, %120 : vector<2x32xf32>
    %cst_63 = arith.constant dense<0.000000e+00> : vector<2x32xf32>
    %122 = tpu.matmul %116, %3, %cst_63 {dimension_numbers = #tpu.dot_dimension_numbers<[1], [0], [0], [1], [0, 0, 1, 1], [], []>} : vector<2x4xf32>, vector<4x32xf32>, vector<2x32xf32> -> vector<2x32xf32>
    %cst_64 = arith.constant dense<0.000000e+00> : vector<2x32xf32>
    %123 = tpu.matmul %113, %11, %cst_64 {dimension_numbers = #tpu.dot_dimension_numbers<[1], [0], [0], [1], [0, 0, 1, 1], [], []>} : vector<2x32xf32>, vector<32x32xf32>, vector<2x32xf32> -> vector<2x32xf32>
    %124 = arith.addf %122, %123 : vector<2x32xf32>
    %125 = vector.broadcast %19 : vector<1x32xf32> to vector<2x32xf32>
    %126 = arith.addf %124, %125 : vector<2x32xf32>
    %cst_65 = arith.constant dense<0.000000e+00> : vector<2x32xf32>
    %127 = tpu.matmul %116, %5, %cst_65 {dimension_numbers = #tpu.dot_dimension_numbers<[1], [0], [0], [1], [0, 0, 1, 1], [], []>} : vector<2x4xf32>, vector<4x32xf32>, vector<2x32xf32> -> vector<2x32xf32>
    %cst_66 = arith.constant dense<0.000000e+00> : vector<2x32xf32>
    %128 = tpu.matmul %113, %13, %cst_66 {dimension_numbers = #tpu.dot_dimension_numbers<[1], [0], [0], [1], [0, 0, 1, 1], [], []>} : vector<2x32xf32>, vector<32x32xf32>, vector<2x32xf32> -> vector<2x32xf32>
    %129 = arith.addf %127, %128 : vector<2x32xf32>
    %130 = vector.broadcast %21 : vector<1x32xf32> to vector<2x32xf32>
    %131 = arith.addf %129, %130 : vector<2x32xf32>
    %cst_67 = arith.constant dense<0.000000e+00> : vector<2x32xf32>
    %132 = tpu.matmul %116, %7, %cst_67 {dimension_numbers = #tpu.dot_dimension_numbers<[1], [0], [0], [1], [0, 0, 1, 1], [], []>} : vector<2x4xf32>, vector<4x32xf32>, vector<2x32xf32> -> vector<2x32xf32>
    %cst_68 = arith.constant dense<0.000000e+00> : vector<2x32xf32>
    %133 = tpu.matmul %113, %15, %cst_68 {dimension_numbers = #tpu.dot_dimension_numbers<[1], [0], [0], [1], [0, 0, 1, 1], [], []>} : vector<2x32xf32>, vector<32x32xf32>, vector<2x32xf32> -> vector<2x32xf32>
    %134 = arith.addf %132, %133 : vector<2x32xf32>
    %135 = vector.broadcast %23 : vector<1x32xf32> to vector<2x32xf32>
    %136 = arith.addf %134, %135 : vector<2x32xf32>
    %137 = arith.negf %121 : vector<2x32xf32>
    %138 = math.exp %137 : vector<2x32xf32>
    %cst_69 = arith.constant 1.000000e+00 : f32
    %139 = vector.broadcast %cst_69 : f32 to vector<2x32xf32>
    %140 = arith.addf %139, %138 : vector<2x32xf32>
    %141 = arith.divf %139, %140 : vector<2x32xf32>
    %142 = arith.negf %126 : vector<2x32xf32>
    %143 = math.exp %142 : vector<2x32xf32>
    %cst_70 = arith.constant 1.000000e+00 : f32
    %144 = vector.broadcast %cst_70 : f32 to vector<2x32xf32>
    %145 = arith.addf %144, %143 : vector<2x32xf32>
    %146 = arith.divf %144, %145 : vector<2x32xf32>
    %147 = math.tanh %131 : vector<2x32xf32>
    %148 = arith.negf %136 : vector<2x32xf32>
    %149 = math.exp %148 : vector<2x32xf32>
    %cst_71 = arith.constant 1.000000e+00 : f32
    %150 = vector.broadcast %cst_71 : f32 to vector<2x32xf32>
    %151 = arith.addf %150, %149 : vector<2x32xf32>
    %152 = arith.divf %150, %151 : vector<2x32xf32>
    %153 = arith.mulf %146, %111 : vector<2x32xf32>
    %154 = arith.mulf %141, %147 : vector<2x32xf32>
    %155 = arith.addf %153, %154 : vector<2x32xf32>
    %156 = math.tanh %155 : vector<2x32xf32>
    %157 = arith.mulf %152, %156 : vector<2x32xf32>
    %c3_i32 = arith.constant 3 : i32
    %158 = arith.index_cast %c3_i32 : i32 to index
    %c0_72 = arith.constant 0 : index
    %c0_73 = arith.constant 0 : index
    %159 = vector.load %arg0[%158, %c0_72, %c0_73] : memref<8x2x4xf32, #tpu.memory_space<vmem>>, vector<1x2x4xf32>
    %160 = vector.shape_cast %159 : vector<1x2x4xf32> to vector<2x4xf32>
    %cst_74 = arith.constant dense<0.000000e+00> : vector<2x32xf32>
    %161 = tpu.matmul %160, %1, %cst_74 {dimension_numbers = #tpu.dot_dimension_numbers<[1], [0], [0], [1], [0, 0, 1, 1], [], []>} : vector<2x4xf32>, vector<4x32xf32>, vector<2x32xf32> -> vector<2x32xf32>
    %cst_75 = arith.constant dense<0.000000e+00> : vector<2x32xf32>
    %162 = tpu.matmul %157, %9, %cst_75 {dimension_numbers = #tpu.dot_dimension_numbers<[1], [0], [0], [1], [0, 0, 1, 1], [], []>} : vector<2x32xf32>, vector<32x32xf32>, vector<2x32xf32> -> vector<2x32xf32>
    %163 = arith.addf %161, %162 : vector<2x32xf32>
    %164 = vector.broadcast %17 : vector<1x32xf32> to vector<2x32xf32>
    %165 = arith.addf %163, %164 : vector<2x32xf32>
    %cst_76 = arith.constant dense<0.000000e+00> : vector<2x32xf32>
    %166 = tpu.matmul %160, %3, %cst_76 {dimension_numbers = #tpu.dot_dimension_numbers<[1], [0], [0], [1], [0, 0, 1, 1], [], []>} : vector<2x4xf32>, vector<4x32xf32>, vector<2x32xf32> -> vector<2x32xf32>
    %cst_77 = arith.constant dense<0.000000e+00> : vector<2x32xf32>
    %167 = tpu.matmul %157, %11, %cst_77 {dimension_numbers = #tpu.dot_dimension_numbers<[1], [0], [0], [1], [0, 0, 1, 1], [], []>} : vector<2x32xf32>, vector<32x32xf32>, vector<2x32xf32> -> vector<2x32xf32>
    %168 = arith.addf %166, %167 : vector<2x32xf32>
    %169 = vector.broadcast %19 : vector<1x32xf32> to vector<2x32xf32>
    %170 = arith.addf %168, %169 : vector<2x32xf32>
    %cst_78 = arith.constant dense<0.000000e+00> : vector<2x32xf32>
    %171 = tpu.matmul %160, %5, %cst_78 {dimension_numbers = #tpu.dot_dimension_numbers<[1], [0], [0], [1], [0, 0, 1, 1], [], []>} : vector<2x4xf32>, vector<4x32xf32>, vector<2x32xf32> -> vector<2x32xf32>
    %cst_79 = arith.constant dense<0.000000e+00> : vector<2x32xf32>
    %172 = tpu.matmul %157, %13, %cst_79 {dimension_numbers = #tpu.dot_dimension_numbers<[1], [0], [0], [1], [0, 0, 1, 1], [], []>} : vector<2x32xf32>, vector<32x32xf32>, vector<2x32xf32> -> vector<2x32xf32>
    %173 = arith.addf %171, %172 : vector<2x32xf32>
    %174 = vector.broadcast %21 : vector<1x32xf32> to vector<2x32xf32>
    %175 = arith.addf %173, %174 : vector<2x32xf32>
    %cst_80 = arith.constant dense<0.000000e+00> : vector<2x32xf32>
    %176 = tpu.matmul %160, %7, %cst_80 {dimension_numbers = #tpu.dot_dimension_numbers<[1], [0], [0], [1], [0, 0, 1, 1], [], []>} : vector<2x4xf32>, vector<4x32xf32>, vector<2x32xf32> -> vector<2x32xf32>
    %cst_81 = arith.constant dense<0.000000e+00> : vector<2x32xf32>
    %177 = tpu.matmul %157, %15, %cst_81 {dimension_numbers = #tpu.dot_dimension_numbers<[1], [0], [0], [1], [0, 0, 1, 1], [], []>} : vector<2x32xf32>, vector<32x32xf32>, vector<2x32xf32> -> vector<2x32xf32>
    %178 = arith.addf %176, %177 : vector<2x32xf32>
    %179 = vector.broadcast %23 : vector<1x32xf32> to vector<2x32xf32>
    %180 = arith.addf %178, %179 : vector<2x32xf32>
    %181 = arith.negf %165 : vector<2x32xf32>
    %182 = math.exp %181 : vector<2x32xf32>
    %cst_82 = arith.constant 1.000000e+00 : f32
    %183 = vector.broadcast %cst_82 : f32 to vector<2x32xf32>
    %184 = arith.addf %183, %182 : vector<2x32xf32>
    %185 = arith.divf %183, %184 : vector<2x32xf32>
    %186 = arith.negf %170 : vector<2x32xf32>
    %187 = math.exp %186 : vector<2x32xf32>
    %cst_83 = arith.constant 1.000000e+00 : f32
    %188 = vector.broadcast %cst_83 : f32 to vector<2x32xf32>
    %189 = arith.addf %188, %187 : vector<2x32xf32>
    %190 = arith.divf %188, %189 : vector<2x32xf32>
    %191 = math.tanh %175 : vector<2x32xf32>
    %192 = arith.negf %180 : vector<2x32xf32>
    %193 = math.exp %192 : vector<2x32xf32>
    %cst_84 = arith.constant 1.000000e+00 : f32
    %194 = vector.broadcast %cst_84 : f32 to vector<2x32xf32>
    %195 = arith.addf %194, %193 : vector<2x32xf32>
    %196 = arith.divf %194, %195 : vector<2x32xf32>
    %197 = arith.mulf %190, %155 : vector<2x32xf32>
    %198 = arith.mulf %185, %191 : vector<2x32xf32>
    %199 = arith.addf %197, %198 : vector<2x32xf32>
    %200 = math.tanh %199 : vector<2x32xf32>
    %201 = arith.mulf %196, %200 : vector<2x32xf32>
    %c4_i32 = arith.constant 4 : i32
    %202 = arith.index_cast %c4_i32 : i32 to index
    %c0_85 = arith.constant 0 : index
    %c0_86 = arith.constant 0 : index
    %203 = vector.load %arg0[%202, %c0_85, %c0_86] : memref<8x2x4xf32, #tpu.memory_space<vmem>>, vector<1x2x4xf32>
    %204 = vector.shape_cast %203 : vector<1x2x4xf32> to vector<2x4xf32>
    %cst_87 = arith.constant dense<0.000000e+00> : vector<2x32xf32>
    %205 = tpu.matmul %204, %1, %cst_87 {dimension_numbers = #tpu.dot_dimension_numbers<[1], [0], [0], [1], [0, 0, 1, 1], [], []>} : vector<2x4xf32>, vector<4x32xf32>, vector<2x32xf32> -> vector<2x32xf32>
    %cst_88 = arith.constant dense<0.000000e+00> : vector<2x32xf32>
    %206 = tpu.matmul %201, %9, %cst_88 {dimension_numbers = #tpu.dot_dimension_numbers<[1], [0], [0], [1], [0, 0, 1, 1], [], []>} : vector<2x32xf32>, vector<32x32xf32>, vector<2x32xf32> -> vector<2x32xf32>
    %207 = arith.addf %205, %206 : vector<2x32xf32>
    %208 = vector.broadcast %17 : vector<1x32xf32> to vector<2x32xf32>
    %209 = arith.addf %207, %208 : vector<2x32xf32>
    %cst_89 = arith.constant dense<0.000000e+00> : vector<2x32xf32>
    %210 = tpu.matmul %204, %3, %cst_89 {dimension_numbers = #tpu.dot_dimension_numbers<[1], [0], [0], [1], [0, 0, 1, 1], [], []>} : vector<2x4xf32>, vector<4x32xf32>, vector<2x32xf32> -> vector<2x32xf32>
    %cst_90 = arith.constant dense<0.000000e+00> : vector<2x32xf32>
    %211 = tpu.matmul %201, %11, %cst_90 {dimension_numbers = #tpu.dot_dimension_numbers<[1], [0], [0], [1], [0, 0, 1, 1], [], []>} : vector<2x32xf32>, vector<32x32xf32>, vector<2x32xf32> -> vector<2x32xf32>
    %212 = arith.addf %210, %211 : vector<2x32xf32>
    %213 = vector.broadcast %19 : vector<1x32xf32> to vector<2x32xf32>
    %214 = arith.addf %212, %213 : vector<2x32xf32>
    %cst_91 = arith.constant dense<0.000000e+00> : vector<2x32xf32>
    %215 = tpu.matmul %204, %5, %cst_91 {dimension_numbers = #tpu.dot_dimension_numbers<[1], [0], [0], [1], [0, 0, 1, 1], [], []>} : vector<2x4xf32>, vector<4x32xf32>, vector<2x32xf32> -> vector<2x32xf32>
    %cst_92 = arith.constant dense<0.000000e+00> : vector<2x32xf32>
    %216 = tpu.matmul %201, %13, %cst_92 {dimension_numbers = #tpu.dot_dimension_numbers<[1], [0], [0], [1], [0, 0, 1, 1], [], []>} : vector<2x32xf32>, vector<32x32xf32>, vector<2x32xf32> -> vector<2x32xf32>
    %217 = arith.addf %215, %216 : vector<2x32xf32>
    %218 = vector.broadcast %21 : vector<1x32xf32> to vector<2x32xf32>
    %219 = arith.addf %217, %218 : vector<2x32xf32>
    %cst_93 = arith.constant dense<0.000000e+00> : vector<2x32xf32>
    %220 = tpu.matmul %204, %7, %cst_93 {dimension_numbers = #tpu.dot_dimension_numbers<[1], [0], [0], [1], [0, 0, 1, 1], [], []>} : vector<2x4xf32>, vector<4x32xf32>, vector<2x32xf32> -> vector<2x32xf32>
    %cst_94 = arith.constant dense<0.000000e+00> : vector<2x32xf32>
    %221 = tpu.matmul %201, %15, %cst_94 {dimension_numbers = #tpu.dot_dimension_numbers<[1], [0], [0], [1], [0, 0, 1, 1], [], []>} : vector<2x32xf32>, vector<32x32xf32>, vector<2x32xf32> -> vector<2x32xf32>
    %222 = arith.addf %220, %221 : vector<2x32xf32>
    %223 = vector.broadcast %23 : vector<1x32xf32> to vector<2x32xf32>
    %224 = arith.addf %222, %223 : vector<2x32xf32>
    %225 = arith.negf %209 : vector<2x32xf32>
    %226 = math.exp %225 : vector<2x32xf32>
    %cst_95 = arith.constant 1.000000e+00 : f32
    %227 = vector.broadcast %cst_95 : f32 to vector<2x32xf32>
    %228 = arith.addf %227, %226 : vector<2x32xf32>
    %229 = arith.divf %227, %228 : vector<2x32xf32>
    %230 = arith.negf %214 : vector<2x32xf32>
    %231 = math.exp %230 : vector<2x32xf32>
    %cst_96 = arith.constant 1.000000e+00 : f32
    %232 = vector.broadcast %cst_96 : f32 to vector<2x32xf32>
    %233 = arith.addf %232, %231 : vector<2x32xf32>
    %234 = arith.divf %232, %233 : vector<2x32xf32>
    %235 = math.tanh %219 : vector<2x32xf32>
    %236 = arith.negf %224 : vector<2x32xf32>
    %237 = math.exp %236 : vector<2x32xf32>
    %cst_97 = arith.constant 1.000000e+00 : f32
    %238 = vector.broadcast %cst_97 : f32 to vector<2x32xf32>
    %239 = arith.addf %238, %237 : vector<2x32xf32>
    %240 = arith.divf %238, %239 : vector<2x32xf32>
    %241 = arith.mulf %234, %199 : vector<2x32xf32>
    %242 = arith.mulf %229, %235 : vector<2x32xf32>
    %243 = arith.addf %241, %242 : vector<2x32xf32>
    %244 = math.tanh %243 : vector<2x32xf32>
    %245 = arith.mulf %240, %244 : vector<2x32xf32>
    %c5_i32 = arith.constant 5 : i32
    %246 = arith.index_cast %c5_i32 : i32 to index
    %c0_98 = arith.constant 0 : index
    %c0_99 = arith.constant 0 : index
    %247 = vector.load %arg0[%246, %c0_98, %c0_99] : memref<8x2x4xf32, #tpu.memory_space<vmem>>, vector<1x2x4xf32>
    %248 = vector.shape_cast %247 : vector<1x2x4xf32> to vector<2x4xf32>
    %cst_100 = arith.constant dense<0.000000e+00> : vector<2x32xf32>
    %249 = tpu.matmul %248, %1, %cst_100 {dimension_numbers = #tpu.dot_dimension_numbers<[1], [0], [0], [1], [0, 0, 1, 1], [], []>} : vector<2x4xf32>, vector<4x32xf32>, vector<2x32xf32> -> vector<2x32xf32>
    %cst_101 = arith.constant dense<0.000000e+00> : vector<2x32xf32>
    %250 = tpu.matmul %245, %9, %cst_101 {dimension_numbers = #tpu.dot_dimension_numbers<[1], [0], [0], [1], [0, 0, 1, 1], [], []>} : vector<2x32xf32>, vector<32x32xf32>, vector<2x32xf32> -> vector<2x32xf32>
    %251 = arith.addf %249, %250 : vector<2x32xf32>
    %252 = vector.broadcast %17 : vector<1x32xf32> to vector<2x32xf32>
    %253 = arith.addf %251, %252 : vector<2x32xf32>
    %cst_102 = arith.constant dense<0.000000e+00> : vector<2x32xf32>
    %254 = tpu.matmul %248, %3, %cst_102 {dimension_numbers = #tpu.dot_dimension_numbers<[1], [0], [0], [1], [0, 0, 1, 1], [], []>} : vector<2x4xf32>, vector<4x32xf32>, vector<2x32xf32> -> vector<2x32xf32>
    %cst_103 = arith.constant dense<0.000000e+00> : vector<2x32xf32>
    %255 = tpu.matmul %245, %11, %cst_103 {dimension_numbers = #tpu.dot_dimension_numbers<[1], [0], [0], [1], [0, 0, 1, 1], [], []>} : vector<2x32xf32>, vector<32x32xf32>, vector<2x32xf32> -> vector<2x32xf32>
    %256 = arith.addf %254, %255 : vector<2x32xf32>
    %257 = vector.broadcast %19 : vector<1x32xf32> to vector<2x32xf32>
    %258 = arith.addf %256, %257 : vector<2x32xf32>
    %cst_104 = arith.constant dense<0.000000e+00> : vector<2x32xf32>
    %259 = tpu.matmul %248, %5, %cst_104 {dimension_numbers = #tpu.dot_dimension_numbers<[1], [0], [0], [1], [0, 0, 1, 1], [], []>} : vector<2x4xf32>, vector<4x32xf32>, vector<2x32xf32> -> vector<2x32xf32>
    %cst_105 = arith.constant dense<0.000000e+00> : vector<2x32xf32>
    %260 = tpu.matmul %245, %13, %cst_105 {dimension_numbers = #tpu.dot_dimension_numbers<[1], [0], [0], [1], [0, 0, 1, 1], [], []>} : vector<2x32xf32>, vector<32x32xf32>, vector<2x32xf32> -> vector<2x32xf32>
    %261 = arith.addf %259, %260 : vector<2x32xf32>
    %262 = vector.broadcast %21 : vector<1x32xf32> to vector<2x32xf32>
    %263 = arith.addf %261, %262 : vector<2x32xf32>
    %cst_106 = arith.constant dense<0.000000e+00> : vector<2x32xf32>
    %264 = tpu.matmul %248, %7, %cst_106 {dimension_numbers = #tpu.dot_dimension_numbers<[1], [0], [0], [1], [0, 0, 1, 1], [], []>} : vector<2x4xf32>, vector<4x32xf32>, vector<2x32xf32> -> vector<2x32xf32>
    %cst_107 = arith.constant dense<0.000000e+00> : vector<2x32xf32>
    %265 = tpu.matmul %245, %15, %cst_107 {dimension_numbers = #tpu.dot_dimension_numbers<[1], [0], [0], [1], [0, 0, 1, 1], [], []>} : vector<2x32xf32>, vector<32x32xf32>, vector<2x32xf32> -> vector<2x32xf32>
    %266 = arith.addf %264, %265 : vector<2x32xf32>
    %267 = vector.broadcast %23 : vector<1x32xf32> to vector<2x32xf32>
    %268 = arith.addf %266, %267 : vector<2x32xf32>
    %269 = arith.negf %253 : vector<2x32xf32>
    %270 = math.exp %269 : vector<2x32xf32>
    %cst_108 = arith.constant 1.000000e+00 : f32
    %271 = vector.broadcast %cst_108 : f32 to vector<2x32xf32>
    %272 = arith.addf %271, %270 : vector<2x32xf32>
    %273 = arith.divf %271, %272 : vector<2x32xf32>
    %274 = arith.negf %258 : vector<2x32xf32>
    %275 = math.exp %274 : vector<2x32xf32>
    %cst_109 = arith.constant 1.000000e+00 : f32
    %276 = vector.broadcast %cst_109 : f32 to vector<2x32xf32>
    %277 = arith.addf %276, %275 : vector<2x32xf32>
    %278 = arith.divf %276, %277 : vector<2x32xf32>
    %279 = math.tanh %263 : vector<2x32xf32>
    %280 = arith.negf %268 : vector<2x32xf32>
    %281 = math.exp %280 : vector<2x32xf32>
    %cst_110 = arith.constant 1.000000e+00 : f32
    %282 = vector.broadcast %cst_110 : f32 to vector<2x32xf32>
    %283 = arith.addf %282, %281 : vector<2x32xf32>
    %284 = arith.divf %282, %283 : vector<2x32xf32>
    %285 = arith.mulf %278, %243 : vector<2x32xf32>
    %286 = arith.mulf %273, %279 : vector<2x32xf32>
    %287 = arith.addf %285, %286 : vector<2x32xf32>
    %288 = math.tanh %287 : vector<2x32xf32>
    %289 = arith.mulf %284, %288 : vector<2x32xf32>
    %c6_i32 = arith.constant 6 : i32
    %290 = arith.index_cast %c6_i32 : i32 to index
    %c0_111 = arith.constant 0 : index
    %c0_112 = arith.constant 0 : index
    %291 = vector.load %arg0[%290, %c0_111, %c0_112] : memref<8x2x4xf32, #tpu.memory_space<vmem>>, vector<1x2x4xf32>
    %292 = vector.shape_cast %291 : vector<1x2x4xf32> to vector<2x4xf32>
    %cst_113 = arith.constant dense<0.000000e+00> : vector<2x32xf32>
    %293 = tpu.matmul %292, %1, %cst_113 {dimension_numbers = #tpu.dot_dimension_numbers<[1], [0], [0], [1], [0, 0, 1, 1], [], []>} : vector<2x4xf32>, vector<4x32xf32>, vector<2x32xf32> -> vector<2x32xf32>
    %cst_114 = arith.constant dense<0.000000e+00> : vector<2x32xf32>
    %294 = tpu.matmul %289, %9, %cst_114 {dimension_numbers = #tpu.dot_dimension_numbers<[1], [0], [0], [1], [0, 0, 1, 1], [], []>} : vector<2x32xf32>, vector<32x32xf32>, vector<2x32xf32> -> vector<2x32xf32>
    %295 = arith.addf %293, %294 : vector<2x32xf32>
    %296 = vector.broadcast %17 : vector<1x32xf32> to vector<2x32xf32>
    %297 = arith.addf %295, %296 : vector<2x32xf32>
    %cst_115 = arith.constant dense<0.000000e+00> : vector<2x32xf32>
    %298 = tpu.matmul %292, %3, %cst_115 {dimension_numbers = #tpu.dot_dimension_numbers<[1], [0], [0], [1], [0, 0, 1, 1], [], []>} : vector<2x4xf32>, vector<4x32xf32>, vector<2x32xf32> -> vector<2x32xf32>
    %cst_116 = arith.constant dense<0.000000e+00> : vector<2x32xf32>
    %299 = tpu.matmul %289, %11, %cst_116 {dimension_numbers = #tpu.dot_dimension_numbers<[1], [0], [0], [1], [0, 0, 1, 1], [], []>} : vector<2x32xf32>, vector<32x32xf32>, vector<2x32xf32> -> vector<2x32xf32>
    %300 = arith.addf %298, %299 : vector<2x32xf32>
    %301 = vector.broadcast %19 : vector<1x32xf32> to vector<2x32xf32>
    %302 = arith.addf %300, %301 : vector<2x32xf32>
    %cst_117 = arith.constant dense<0.000000e+00> : vector<2x32xf32>
    %303 = tpu.matmul %292, %5, %cst_117 {dimension_numbers = #tpu.dot_dimension_numbers<[1], [0], [0], [1], [0, 0, 1, 1], [], []>} : vector<2x4xf32>, vector<4x32xf32>, vector<2x32xf32> -> vector<2x32xf32>
    %cst_118 = arith.constant dense<0.000000e+00> : vector<2x32xf32>
    %304 = tpu.matmul %289, %13, %cst_118 {dimension_numbers = #tpu.dot_dimension_numbers<[1], [0], [0], [1], [0, 0, 1, 1], [], []>} : vector<2x32xf32>, vector<32x32xf32>, vector<2x32xf32> -> vector<2x32xf32>
    %305 = arith.addf %303, %304 : vector<2x32xf32>
    %306 = vector.broadcast %21 : vector<1x32xf32> to vector<2x32xf32>
    %307 = arith.addf %305, %306 : vector<2x32xf32>
    %cst_119 = arith.constant dense<0.000000e+00> : vector<2x32xf32>
    %308 = tpu.matmul %292, %7, %cst_119 {dimension_numbers = #tpu.dot_dimension_numbers<[1], [0], [0], [1], [0, 0, 1, 1], [], []>} : vector<2x4xf32>, vector<4x32xf32>, vector<2x32xf32> -> vector<2x32xf32>
    %cst_120 = arith.constant dense<0.000000e+00> : vector<2x32xf32>
    %309 = tpu.matmul %289, %15, %cst_120 {dimension_numbers = #tpu.dot_dimension_numbers<[1], [0], [0], [1], [0, 0, 1, 1], [], []>} : vector<2x32xf32>, vector<32x32xf32>, vector<2x32xf32> -> vector<2x32xf32>
    %310 = arith.addf %308, %309 : vector<2x32xf32>
    %311 = vector.broadcast %23 : vector<1x32xf32> to vector<2x32xf32>
    %312 = arith.addf %310, %311 : vector<2x32xf32>
    %313 = arith.negf %297 : vector<2x32xf32>
    %314 = math.exp %313 : vector<2x32xf32>
    %cst_121 = arith.constant 1.000000e+00 : f32
    %315 = vector.broadcast %cst_121 : f32 to vector<2x32xf32>
    %316 = arith.addf %315, %314 : vector<2x32xf32>
    %317 = arith.divf %315, %316 : vector<2x32xf32>
    %318 = arith.negf %302 : vector<2x32xf32>
    %319 = math.exp %318 : vector<2x32xf32>
    %cst_122 = arith.constant 1.000000e+00 : f32
    %320 = vector.broadcast %cst_122 : f32 to vector<2x32xf32>
    %321 = arith.addf %320, %319 : vector<2x32xf32>
    %322 = arith.divf %320, %321 : vector<2x32xf32>
    %323 = math.tanh %307 : vector<2x32xf32>
    %324 = arith.negf %312 : vector<2x32xf32>
    %325 = math.exp %324 : vector<2x32xf32>
    %cst_123 = arith.constant 1.000000e+00 : f32
    %326 = vector.broadcast %cst_123 : f32 to vector<2x32xf32>
    %327 = arith.addf %326, %325 : vector<2x32xf32>
    %328 = arith.divf %326, %327 : vector<2x32xf32>
    %329 = arith.mulf %322, %287 : vector<2x32xf32>
    %330 = arith.mulf %317, %323 : vector<2x32xf32>
    %331 = arith.addf %329, %330 : vector<2x32xf32>
    %332 = math.tanh %331 : vector<2x32xf32>
    %333 = arith.mulf %328, %332 : vector<2x32xf32>
    %c7_i32 = arith.constant 7 : i32
    %334 = arith.index_cast %c7_i32 : i32 to index
    %c0_124 = arith.constant 0 : index
    %c0_125 = arith.constant 0 : index
    %335 = vector.load %arg0[%334, %c0_124, %c0_125] : memref<8x2x4xf32, #tpu.memory_space<vmem>>, vector<1x2x4xf32>
    %336 = vector.shape_cast %335 : vector<1x2x4xf32> to vector<2x4xf32>
    %cst_126 = arith.constant dense<0.000000e+00> : vector<2x32xf32>
    %337 = tpu.matmul %336, %1, %cst_126 {dimension_numbers = #tpu.dot_dimension_numbers<[1], [0], [0], [1], [0, 0, 1, 1], [], []>} : vector<2x4xf32>, vector<4x32xf32>, vector<2x32xf32> -> vector<2x32xf32>
    %cst_127 = arith.constant dense<0.000000e+00> : vector<2x32xf32>
    %338 = tpu.matmul %333, %9, %cst_127 {dimension_numbers = #tpu.dot_dimension_numbers<[1], [0], [0], [1], [0, 0, 1, 1], [], []>} : vector<2x32xf32>, vector<32x32xf32>, vector<2x32xf32> -> vector<2x32xf32>
    %339 = arith.addf %337, %338 : vector<2x32xf32>
    %340 = vector.broadcast %17 : vector<1x32xf32> to vector<2x32xf32>
    %341 = arith.addf %339, %340 : vector<2x32xf32>
    %cst_128 = arith.constant dense<0.000000e+00> : vector<2x32xf32>
    %342 = tpu.matmul %336, %3, %cst_128 {dimension_numbers = #tpu.dot_dimension_numbers<[1], [0], [0], [1], [0, 0, 1, 1], [], []>} : vector<2x4xf32>, vector<4x32xf32>, vector<2x32xf32> -> vector<2x32xf32>
    %cst_129 = arith.constant dense<0.000000e+00> : vector<2x32xf32>
    %343 = tpu.matmul %333, %11, %cst_129 {dimension_numbers = #tpu.dot_dimension_numbers<[1], [0], [0], [1], [0, 0, 1, 1], [], []>} : vector<2x32xf32>, vector<32x32xf32>, vector<2x32xf32> -> vector<2x32xf32>
    %344 = arith.addf %342, %343 : vector<2x32xf32>
    %345 = vector.broadcast %19 : vector<1x32xf32> to vector<2x32xf32>
    %346 = arith.addf %344, %345 : vector<2x32xf32>
    %cst_130 = arith.constant dense<0.000000e+00> : vector<2x32xf32>
    %347 = tpu.matmul %336, %5, %cst_130 {dimension_numbers = #tpu.dot_dimension_numbers<[1], [0], [0], [1], [0, 0, 1, 1], [], []>} : vector<2x4xf32>, vector<4x32xf32>, vector<2x32xf32> -> vector<2x32xf32>
    %cst_131 = arith.constant dense<0.000000e+00> : vector<2x32xf32>
    %348 = tpu.matmul %333, %13, %cst_131 {dimension_numbers = #tpu.dot_dimension_numbers<[1], [0], [0], [1], [0, 0, 1, 1], [], []>} : vector<2x32xf32>, vector<32x32xf32>, vector<2x32xf32> -> vector<2x32xf32>
    %349 = arith.addf %347, %348 : vector<2x32xf32>
    %350 = vector.broadcast %21 : vector<1x32xf32> to vector<2x32xf32>
    %351 = arith.addf %349, %350 : vector<2x32xf32>
    %cst_132 = arith.constant dense<0.000000e+00> : vector<2x32xf32>
    %352 = tpu.matmul %336, %7, %cst_132 {dimension_numbers = #tpu.dot_dimension_numbers<[1], [0], [0], [1], [0, 0, 1, 1], [], []>} : vector<2x4xf32>, vector<4x32xf32>, vector<2x32xf32> -> vector<2x32xf32>
    %cst_133 = arith.constant dense<0.000000e+00> : vector<2x32xf32>
    %353 = tpu.matmul %333, %15, %cst_133 {dimension_numbers = #tpu.dot_dimension_numbers<[1], [0], [0], [1], [0, 0, 1, 1], [], []>} : vector<2x32xf32>, vector<32x32xf32>, vector<2x32xf32> -> vector<2x32xf32>
    %354 = arith.addf %352, %353 : vector<2x32xf32>
    %355 = vector.broadcast %23 : vector<1x32xf32> to vector<2x32xf32>
    %356 = arith.addf %354, %355 : vector<2x32xf32>
    %357 = arith.negf %341 : vector<2x32xf32>
    %358 = math.exp %357 : vector<2x32xf32>
    %cst_134 = arith.constant 1.000000e+00 : f32
    %359 = vector.broadcast %cst_134 : f32 to vector<2x32xf32>
    %360 = arith.addf %359, %358 : vector<2x32xf32>
    %361 = arith.divf %359, %360 : vector<2x32xf32>
    %362 = arith.negf %346 : vector<2x32xf32>
    %363 = math.exp %362 : vector<2x32xf32>
    %cst_135 = arith.constant 1.000000e+00 : f32
    %364 = vector.broadcast %cst_135 : f32 to vector<2x32xf32>
    %365 = arith.addf %364, %363 : vector<2x32xf32>
    %366 = arith.divf %364, %365 : vector<2x32xf32>
    %367 = math.tanh %351 : vector<2x32xf32>
    %368 = arith.negf %356 : vector<2x32xf32>
    %369 = math.exp %368 : vector<2x32xf32>
    %cst_136 = arith.constant 1.000000e+00 : f32
    %370 = vector.broadcast %cst_136 : f32 to vector<2x32xf32>
    %371 = arith.addf %370, %369 : vector<2x32xf32>
    %372 = arith.divf %370, %371 : vector<2x32xf32>
    %373 = arith.mulf %366, %331 : vector<2x32xf32>
    %374 = arith.mulf %361, %367 : vector<2x32xf32>
    %375 = arith.addf %373, %374 : vector<2x32xf32>
    %376 = math.tanh %375 : vector<2x32xf32>
    %377 = arith.mulf %372, %376 : vector<2x32xf32>
    %c8_i32 = arith.constant 8 : i32
    %c0_137 = arith.constant 0 : index
    %c0_138 = arith.constant 0 : index
    %378 = vector.load %arg4[%c0_137, %c0_138] : memref<32x4xf32, #tpu.memory_space<vmem>>, vector<32x4xf32>
    %cst_139 = arith.constant dense<0.000000e+00> : vector<2x4xf32>
    %379 = tpu.matmul %377, %378, %cst_139 {dimension_numbers = #tpu.dot_dimension_numbers<[1], [0], [0], [1], [0, 0, 1, 1], [], []>} : vector<2x32xf32>, vector<32x4xf32>, vector<2x4xf32> -> vector<2x4xf32>
    %c0_140 = arith.constant 0 : index
    %c0_141 = arith.constant 0 : index
    %380 = vector.load %arg5[%c0_140, %c0_141] : memref<1x4xf32, #tpu.memory_space<vmem>>, vector<1x4xf32>
    %381 = vector.broadcast %380 : vector<1x4xf32> to vector<2x4xf32>
    %382 = arith.addf %379, %381 : vector<2x4xf32>
    %c0_142 = arith.constant 0 : index
    %c0_143 = arith.constant 0 : index
    %383 = vector.load %arg6[%c0_142, %c0_143] : memref<2x4xf32, #tpu.memory_space<vmem>>, vector<2x4xf32>
    tpu.vector_store %arg6[%c0_142, %c0_143], %382 {strides = array<i32>} : memref<2x4xf32, #tpu.memory_space<vmem>>, vector<2x4xf32>,
    return
  }
}

</mosaic_0001>

<llo_original>
// kernel: taxi_driver_lstm.1
$region0: #{taxi_driver_lstm.1}
  #allocation0 [shape = 'u32[]', space=smem, size = 0x4, offset = 0x4, fixed_abs, tag = 'smem constant byte address 0x4 - core index']
  #allocation1 [shape = 'u32[72,128]{1,0:T(1,128)}', space=vmem, size = 0x9000, scoped, tag = 'internal scratch']
  %s0 = inlined_call_operand.vmem [shape: f32[8,2,4], index: 0, kind: input, shape index: {}]
  %s1 = inlined_call_operand.vmem [shape: f32[4,4,32], index: 1, kind: input, shape index: {}]
  %s2 = inlined_call_operand.vmem [shape: f32[4,32,32], index: 2, kind: input, shape index: {}]
  %s3 = inlined_call_operand.vmem [shape: f32[4,1,32], index: 3, kind: input, shape index: {}]
  %s4 = inlined_call_operand.vmem [shape: f32[32,4], index: 4, kind: input, shape index: {}]
  %s5 = inlined_call_operand.vmem [shape: f32[1,4], index: 5, kind: input, shape index: {}]
  %s6 = inlined_call_operand.hbm [shape: f32[2,4], index: 6, kind: output, shape index: {}]
  %s7 = sld [smem:[#allocation0]]
  $region34: #{taxi_driver_lstm.1} parent=0
    _
  %s9 = ssub.s32 1, %s7
  %s10 = scalar_select 0, %s9, %s7
  $region1: #{taxi_driver_lstm.1} parent=0
    #allocation2 [shape = 'u8[1024]{0}', space=vmem, size = 0x400, scoped, tag = 'output window, operand 0, single buffered']
    #allocation3 [shape = 's32[1]{0}', space=sflag, size = 0x4, scoped, tag = 'scoped memory for taxi_driver_lstm.1']
    %11 = vsyncpa [#allocation3], 0
    // Predicated region
    $region2: #{taxi_driver_lstm.1} parent=1 // pred_check
      _
    $region3: #{taxi_driver_lstm.1} parent=1 // pred_check_branch
      %13 = sbr.rel (0) target = $region5
    $region4: #{taxi_driver_lstm.1} parent=1 // pred_region
      _
    $region5: #{taxi_driver_lstm.1} parent=1 // pred_fallthru
      _
    // Predicated region
    $region6: #{taxi_driver_lstm.1} parent=1 // pred_check
      _
    $region7: #{taxi_driver_lstm.1} parent=1 // pred_check_branch
      %15 = sbr.rel (0) target = $region9
    $region8: #{taxi_driver_lstm.1} parent=1 // pred_region
      _
    $region9: #{taxi_driver_lstm.1} parent=1 // pred_fallthru
      _
    // Predicated region
    $region10: #{taxi_driver_lstm.1} parent=1 // pred_check
      _
    $region11: #{taxi_driver_lstm.1} parent=1 // pred_check_branch
      %17 = sbr.rel (0) target = $region13
    $region12: #{taxi_driver_lstm.1} parent=1 // pred_region
      _
    $region13: #{taxi_driver_lstm.1} parent=1 // pred_fallthru
      _
    // Predicated region
    $region14: #{taxi_driver_lstm.1} parent=1 // pred_check
      _
    $region15: #{taxi_driver_lstm.1} parent=1 // pred_check_branch
      %19 = sbr.rel (0) target = $region17
    $region16: #{taxi_driver_lstm.1} parent=1 // pred_region
      _
    $region17: #{taxi_driver_lstm.1} parent=1 // pred_fallthru
      _
    // Predicated region
    $region18: #{taxi_driver_lstm.1} parent=1 // pred_check
      _
    $region19: #{taxi_driver_lstm.1} parent=1 // pred_check_branch
      %21 = sbr.rel (0) target = $region21
    $region20: #{taxi_driver_lstm.1} parent=1 // pred_region
      _
    $region21: #{taxi_driver_lstm.1} parent=1 // pred_fallthru
      _
    // Predicated region
    $region22: #{taxi_driver_lstm.1} parent=1 // pred_check
      _
    $region23: #{taxi_driver_lstm.1} parent=1 // pred_check_branch
      %23 = sbr.rel (0) target = $region25
    $region24: #{taxi_driver_lstm.1} parent=1 // pred_region
      _
    $region25: #{taxi_driver_lstm.1} parent=1 // pred_fallthru
      _
    %v24 = vld [vmem:[%s1] sm:$0xf]
    %s25 = scalar_lea.vmem %s1, 4
    %v26 = vld [vmem:[%s25] sm:$0xf]
    %s27 = scalar_lea.vmem %s1, 8
    %v28 = vld [vmem:[%s27] sm:$0xf]
    %s29 = scalar_lea.vmem %s1, 12
    %v30 = vld [vmem:[%s29] sm:$0xf]
    %v31 = vld [vmem:[%s2] sm:$0xff]
    %v32 = vld [vmem:[%s2 + $0x8] sm:$0xff]
    %v33 = vld [vmem:[%s2 + $0x10] sm:$0xff]
    %v34 = vld [vmem:[%s2 + $0x18] sm:$0xff]
    %s35 = scalar_lea.vmem %s2, 32
    %v36 = vld [vmem:[%s35] sm:$0xff]
    %v37 = vld [vmem:[%s35 + $0x8] sm:$0xff]
    %v38 = vld [vmem:[%s35 + $0x10] sm:$0xff]
    %v39 = vld [vmem:[%s35 + $0x18] sm:$0xff]
    %s40 = scalar_lea.vmem %s2, 64
    %v41 = vld [vmem:[%s40] sm:$0xff]
    %v42 = vld [vmem:[%s40 + $0x8] sm:$0xff]
    %v43 = vld [vmem:[%s40 + $0x10] sm:$0xff]
    %v44 = vld [vmem:[%s40 + $0x18] sm:$0xff]
    %s45 = scalar_lea.vmem %s2, 96
    %v46 = vld [vmem:[%s45] sm:$0xff]
    %v47 = vld [vmem:[%s45 + $0x8] sm:$0xff]
    %v48 = vld [vmem:[%s45 + $0x10] sm:$0xff]
    %v49 = vld [vmem:[%s45 + $0x18] sm:$0xff]
    %v50 = vld [vmem:[%s3] sm:$0x1]
    %s51 = scalar_lea.vmem %s3, 1
    %v52 = vld [vmem:[%s51] sm:$0x1]
    %s53 = scalar_lea.vmem %s3, 2
    %v54 = vld [vmem:[%s53] sm:$0x1]
    %s55 = scalar_lea.vmem %s3, 3
    %v56 = vld [vmem:[%s55] sm:$0x1]
    %v57 = vld [vmem:[%s0] sm:$0x3]
    %vm58 = vcmask 261120
    %v60 = vsel %vm58, 0.0, 0
    %62 = vmatpush.msra.mxu0 0.0
    %63 = vmatpush.msra.mxu0 0.0
    %64 = vmatpush.msra.mxu0 0.0
    %65 = vmatpush.msra.mxu0 0.0
    %66 = vmatpush.msra.mxu0 0.0
    %67 = vmatpush.msra.mxu0 0.0
    %68 = vmatpush.msra.mxu0 0.0
    %69 = vmatpush.msra.mxu0 0.0
    %70 = vmatpush.msra.mxu0 0.0
    %71 = vmatpush.msra.mxu0 0.0
    %72 = vmatpush.msra.mxu0 0.0
    %73 = vmatpush.msra.mxu0 0.0
    %74 = vmatpush.msra.mxu0 %v34
    %75 = vmatpush.msra.mxu0 %v33
    %76 = vmatpush.msra.mxu0 %v32
    %77 = vmatpush.msra.mxu0 %v31
    %78 = vmatmul.f32.gmra.mxu0 %v60
    %v79 = vpop.f32.mrf.mxu0
    %v80 = vadd.f32 0.0, %v79
    %81 = vdwg.mxu0
    %vm82 = vcmask 31744
    %v84 = vsel %vm82, %v57, 0
    %vm86 = vcmask 1043456
    %v88 = vsel %vm86, %v24, 0
    %90 = vmatpush.msra.mxu0 0.0
    %91 = vmatpush.msra.mxu0 0.0
    %92 = vmatpush.msra.mxu0 0.0
    %93 = vmatpush.msra.mxu0 0.0
    %94 = vmatpush.msra.mxu0 0.0
    %95 = vmatpush.msra.mxu0 0.0
    %96 = vmatpush.msra.mxu0 0.0
    %97 = vmatpush.msra.mxu0 0.0
    %98 = vmatpush.msra.mxu0 0.0
    %99 = vmatpush.msra.mxu0 0.0
    %100 = vmatpush.msra.mxu0 0.0
    %101 = vmatpush.msra.mxu0 0.0
    %102 = vmatpush.msra.mxu0 0.0
    %103 = vmatpush.msra.mxu0 0.0
    %104 = vmatpush.msra.mxu0 0.0
    %105 = vmatpush.msra.mxu0 %v88
    %106 = vmatmul.f32.gmra.mxu0 %v84
    %v107 = vpop.f32.mrf.mxu0
    %v108 = vadd.f32 %v80, %v107
    %109 = vdwg.mxu0
    %v111 = vperm.slane %v50, 0
    %v113 = vadd.f32 %v108, %v111
    %114 = vmatpush.msra.mxu0 0.0
    %115 = vmatpush.msra.mxu0 0.0
    %116 = vmatpush.msra.mxu0 0.0
    %117 = vmatpush.msra.mxu0 0.0
    %118 = vmatpush.msra.mxu0 0.0
    %119 = vmatpush.msra.mxu0 0.0
    %120 = vmatpush.msra.mxu0 0.0
    %121 = vmatpush.msra.mxu0 0.0
    %122 = vmatpush.msra.mxu0 0.0
    %123 = vmatpush.msra.mxu0 0.0
    %124 = vmatpush.msra.mxu0 0.0
    %125 = vmatpush.msra.mxu0 0.0
    %126 = vmatpush.msra.mxu0 %v39
    %127 = vmatpush.msra.mxu0 %v38
    %128 = vmatpush.msra.mxu0 %v37
    %129 = vmatpush.msra.mxu0 %v36
    %130 = vmatmul.f32.gmra.mxu0 %v60
    %v131 = vpop.f32.mrf.mxu0
    %v132 = vadd.f32 0.0, %v131
    %133 = vdwg.mxu0
    %v135 = vsel %vm86, %v26, 0
    %137 = vmatpush.msra.mxu0 0.0
    %138 = vmatpush.msra.mxu0 0.0
    %139 = vmatpush.msra.mxu0 0.0
    %140 = vmatpush.msra.mxu0 0.0
    %141 = vmatpush.msra.mxu0 0.0
    %142 = vmatpush.msra.mxu0 0.0
    %143 = vmatpush.msra.mxu0 0.0
    %144 = vmatpush.msra.mxu0 0.0
    %145 = vmatpush.msra.mxu0 0.0
    %146 = vmatpush.msra.mxu0 0.0
    %147 = vmatpush.msra.mxu0 0.0
    %148 = vmatpush.msra.mxu0 0.0
    %149 = vmatpush.msra.mxu0 0.0
    %150 = vmatpush.msra.mxu0 0.0
    %151 = vmatpush.msra.mxu0 0.0
    %152 = vmatpush.msra.mxu0 %v135
    %153 = vmatmul.f32.gmra.mxu0 %v84
    %v154 = vpop.f32.mrf.mxu0
    %v155 = vadd.f32 %v132, %v154
    %156 = vdwg.mxu0
    %v158 = vperm.slane %v52, 0
    %v160 = vadd.f32 %v155, %v158
    %161 = vmatpush.msra.mxu0 0.0
    %162 = vmatpush.msra.mxu0 0.0
    %163 = vmatpush.msra.mxu0 0.0
    %164 = vmatpush.msra.mxu0 0.0
    %165 = vmatpush.msra.mxu0 0.0
    %166 = vmatpush.msra.mxu0 0.0
    %167 = vmatpush.msra.mxu0 0.0
    %168 = vmatpush.msra.mxu0 0.0
    %169 = vmatpush.msra.mxu0 0.0
    %170 = vmatpush.msra.mxu0 0.0
    %171 = vmatpush.msra.mxu0 0.0
    %172 = vmatpush.msra.mxu0 0.0
    %173 = vmatpush.msra.mxu0 %v44
    %174 = vmatpush.msra.mxu0 %v43
    %175 = vmatpush.msra.mxu0 %v42
    %176 = vmatpush.msra.mxu0 %v41
    %177 = vmatmul.f32.gmra.mxu0 %v60
    %v178 = vpop.f32.mrf.mxu0
    %v179 = vadd.f32 0.0, %v178
    %180 = vdwg.mxu0
    %v182 = vsel %vm86, %v28, 0
    %184 = vmatpush.msra.mxu0 0.0
    %185 = vmatpush.msra.mxu0 0.0
    %186 = vmatpush.msra.mxu0 0.0
    %187 = vmatpush.msra.mxu0 0.0
    %188 = vmatpush.msra.mxu0 0.0
    %189 = vmatpush.msra.mxu0 0.0
    %190 = vmatpush.msra.mxu0 0.0
    %191 = vmatpush.msra.mxu0 0.0
    %192 = vmatpush.msra.mxu0 0.0
    %193 = vmatpush.msra.mxu0 0.0
    %194 = vmatpush.msra.mxu0 0.0
    %195 = vmatpush.msra.mxu0 0.0
    %196 = vmatpush.msra.mxu0 0.0
    %197 = vmatpush.msra.mxu0 0.0
    %198 = vmatpush.msra.mxu0 0.0
    %199 = vmatpush.msra.mxu0 %v182
    %200 = vmatmul.f32.gmra.mxu0 %v84
    %v201 = vpop.f32.mrf.mxu0
    %v202 = vadd.f32 %v179, %v201
    %203 = vdwg.mxu0
    %v205 = vperm.slane %v54, 0
    %v207 = vadd.f32 %v202, %v205
    %208 = vmatpush.msra.mxu0 0.0
    %209 = vmatpush.msra.mxu0 0.0
    %210 = vmatpush.msra.mxu0 0.0
    %211 = vmatpush.msra.mxu0 0.0
    %212 = vmatpush.msra.mxu0 0.0
    %213 = vmatpush.msra.mxu0 0.0
    %214 = vmatpush.msra.mxu0 0.0
    %215 = vmatpush.msra.mxu0 0.0
    %216 = vmatpush.msra.mxu0 0.0
    %217 = vmatpush.msra.mxu0 0.0
    %218 = vmatpush.msra.mxu0 0.0
    %219 = vmatpush.msra.mxu0 0.0
    %220 = vmatpush.msra.mxu0 %v49
    %221 = vmatpush.msra.mxu0 %v48
    %222 = vmatpush.msra.mxu0 %v47
    %223 = vmatpush.msra.mxu0 %v46
    %224 = vmatmul.f32.gmra.mxu0 %v60
    %v225 = vpop.f32.mrf.mxu0
    %v226 = vadd.f32 0.0, %v225
    %227 = vdwg.mxu0
    %v229 = vsel %vm86, %v30, 0
    %231 = vmatpush.msra.mxu0 0.0
    %232 = vmatpush.msra.mxu0 0.0
    %233 = vmatpush.msra.mxu0 0.0
    %234 = vmatpush.msra.mxu0 0.0
    %235 = vmatpush.msra.mxu0 0.0
    %236 = vmatpush.msra.mxu0 0.0
    %237 = vmatpush.msra.mxu0 0.0
    %238 = vmatpush.msra.mxu0 0.0
    %239 = vmatpush.msra.mxu0 0.0
    %240 = vmatpush.msra.mxu0 0.0
    %241 = vmatpush.msra.mxu0 0.0
    %242 = vmatpush.msra.mxu0 0.0
    %243 = vmatpush.msra.mxu0 0.0
    %244 = vmatpush.msra.mxu0 0.0
    %245 = vmatpush.msra.mxu0 0.0
    %246 = vmatpush.msra.mxu0 %v229
    %247 = vmatmul.f32.gmra.mxu0 %v84
    %v248 = vpop.f32.mrf.mxu0
    %v249 = vadd.f32 %v226, %v248
    %250 = vdwg.mxu0
    %v252 = vperm.slane %v56, 0
    %v254 = vadd.f32 %v249, %v252
    %v255 = vxor.u32 %v113, 2147483648
    %v256 = vmul.f32 %v255, 1.442695
    %v257 = vpow.pop %v256
    %v258 = vadd.f32 %v257, 1.0
    %v259 = vrcp.pop %v258
    %v260 = vmul.f32 %v258, %v259
    %v261 = vsub.f32 1.0, %v260
    %v262 = vmul.f32 %v259, %v261
    %v263 = vadd.f32 %v259, %v262
    %vm264 = vweird.f32 %v258
    %vm265 = vweird.f32 %v259
    %vm266 = vmor %vm264, %vm265
    %v267 = vsel %vm266, %v259, %v263
    %v268 = vand.u32 2147483647, %v258
    %vm269 = vcmp.eq.f32.partialorder %v268, 8.507059e+37
    %v270 = vand.u32 %v258, 2147483648
    %v271 = vor.u32 1.1754944e-38, %v270
    %v272 = vsel %vm269, %v271, %v267
    %v273 = vmul.f32 1.0, %v272
    %v274 = vxor.u32 %v160, 2147483648
    %v275 = vmul.f32 %v274, 1.442695
    %v276 = vpow.pop %v275
    %v277 = vadd.f32 %v276, 1.0
    %v278 = vrcp.pop %v277
    %v279 = vmul.f32 %v277, %v278
    %v280 = vsub.f32 1.0, %v279
    %v281 = vmul.f32 %v278, %v280
    %v282 = vadd.f32 %v278, %v281
    %vm283 = vweird.f32 %v277
    %vm284 = vweird.f32 %v278
    %vm285 = vmor %vm283, %vm284
    %v286 = vsel %vm285, %v278, %v282
    %v287 = vand.u32 2147483647, %v277
    %vm288 = vcmp.eq.f32.partialorder %v287, 8.507059e+37
    %v289 = vand.u32 %v277, 2147483648
    %v290 = vor.u32 1.1754944e-38, %v289
    %v291 = vsel %vm288, %v290, %v286
    %v292 = vmul.f32 1.0, %v291
    %v293 = vtanh.pop %v207
    %v294 = vxor.u32 %v254, 2147483648
    %v295 = vmul.f32 %v294, 1.442695
    %v296 = vpow.pop %v295
    %v297 = vadd.f32 %v296, 1.0
    %v298 = vrcp.pop %v297
    %v299 = vmul.f32 %v297, %v298
    %v300 = vsub.f32 1.0, %v299
    %v301 = vmul.f32 %v298, %v300
    %v302 = vadd.f32 %v298, %v301
    %vm303 = vweird.f32 %v297
    %vm304 = vweird.f32 %v298
    %vm305 = vmor %vm303, %vm304
    %v306 = vsel %vm305, %v298, %v302
    %v307 = vand.u32 2147483647, %v297
    %vm308 = vcmp.eq.f32.partialorder %v307, 8.507059e+37
    %v309 = vand.u32 %v297, 2147483648
    %v310 = vor.u32 1.1754944e-38, %v309
    %v311 = vsel %vm308, %v310, %v306
    %v312 = vmul.f32 1.0, %v311
    %v313 = vmul.f32 %v292, 0.0
    %v314 = vmul.f32 %v273, %v293
    %v315 = vadd.f32 %v313, %v314
    %v316 = vtanh.pop %v315
    %v317 = vmul.f32 %v312, %v316
    %s318 = scalar_lea.vmem %s0, 2
    %v319 = vld [vmem:[%s318] sm:$0x3]
    %v321 = vsel %vm58, %v317, 0
    %323 = vmatpush.msra.mxu0 0.0
    %324 = vmatpush.msra.mxu0 0.0
    %325 = vmatpush.msra.mxu0 0.0
    %326 = vmatpush.msra.mxu0 0.0
    %327 = vmatpush.msra.mxu0 0.0
    %328 = vmatpush.msra.mxu0 0.0
    %329 = vmatpush.msra.mxu0 0.0
    %330 = vmatpush.msra.mxu0 0.0
    %331 = vmatpush.msra.mxu0 0.0
    %332 = vmatpush.msra.mxu0 0.0
    %333 = vmatpush.msra.mxu0 0.0
    %334 = vmatpush.msra.mxu0 0.0
    %335 = vmatpush.msra.mxu0 %v34
    %336 = vmatpush.msra.mxu0 %v33
    %337 = vmatpush.msra.mxu0 %v32
    %338 = vmatpush.msra.mxu0 %v31
    %339 = vmatmul.f32.gmra.mxu0 %v321
    %v340 = vpop.f32.mrf.mxu0
    %v341 = vadd.f32 0.0, %v340
    %342 = vdwg.mxu0
    %v344 = vsel %vm82, %v319, 0
    %346 = vmatpush.msra.mxu0 0.0
    %347 = vmatpush.msra.mxu0 0.0
    %348 = vmatpush.msra.mxu0 0.0
    %349 = vmatpush.msra.mxu0 0.0
    %350 = vmatpush.msra.mxu0 0.0
    %351 = vmatpush.msra.mxu0 0.0
    %352 = vmatpush.msra.mxu0 0.0
    %353 = vmatpush.msra.mxu0 0.0
    %354 = vmatpush.msra.mxu0 0.0
    %355 = vmatpush.msra.mxu0 0.0
    %356 = vmatpush.msra.mxu0 0.0
    %357 = vmatpush.msra.mxu0 0.0
    %358 = vmatpush.msra.mxu0 0.0
    %359 = vmatpush.msra.mxu0 0.0
    %360 = vmatpush.msra.mxu0 0.0
    %361 = vmatpush.msra.mxu0 %v88
    %362 = vmatmul.f32.gmra.mxu0 %v344
    %v363 = vpop.f32.mrf.mxu0
    %v364 = vadd.f32 %v341, %v363
    %365 = vdwg.mxu0
    %v366 = vadd.f32 %v364, %v111
    %367 = vmatpush.msra.mxu0 0.0
    %368 = vmatpush.msra.mxu0 0.0
    %369 = vmatpush.msra.mxu0 0.0
    %370 = vmatpush.msra.mxu0 0.0
    %371 = vmatpush.msra.mxu0 0.0
    %372 = vmatpush.msra.mxu0 0.0
    %373 = vmatpush.msra.mxu0 0.0
    %374 = vmatpush.msra.mxu0 0.0
    %375 = vmatpush.msra.mxu0 0.0
    %376 = vmatpush.msra.mxu0 0.0
    %377 = vmatpush.msra.mxu0 0.0
    %378 = vmatpush.msra.mxu0 0.0
    %379 = vmatpush.msra.mxu0 %v39
    %380 = vmatpush.msra.mxu0 %v38
    %381 = vmatpush.msra.mxu0 %v37
    %382 = vmatpush.msra.mxu0 %v36
    %383 = vmatmul.f32.gmra.mxu0 %v321
    %v384 = vpop.f32.mrf.mxu0
    %v385 = vadd.f32 0.0, %v384
    %386 = vdwg.mxu0
    %387 = vmatpush.msra.mxu0 0.0
    %388 = vmatpush.msra.mxu0 0.0
    %389 = vmatpush.msra.mxu0 0.0
    %390 = vmatpush.msra.mxu0 0.0
    %391 = vmatpush.msra.mxu0 0.0
    %392 = vmatpush.msra.mxu0 0.0
    %393 = vmatpush.msra.mxu0 0.0
    %394 = vmatpush.msra.mxu0 0.0
    %395 = vmatpush.msra.mxu0 0.0
    %396 = vmatpush.msra.mxu0 0.0
    %397 = vmatpush.msra.mxu0 0.0
    %398 = vmatpush.msra.mxu0 0.0
    %399 = vmatpush.msra.mxu0 0.0
    %400 = vmatpush.msra.mxu0 0.0
    %401 = vmatpush.msra.mxu0 0.0
    %402 = vmatpush.msra.mxu0 %v135
    %403 = vmatmul.f32.gmra.mxu0 %v344
    %v404 = vpop.f32.mrf.mxu0
    %v405 = vadd.f32 %v385, %v404
    %406 = vdwg.mxu0
    %v407 = vadd.f32 %v405, %v158
    %408 = vmatpush.msra.mxu0 0.0
    %409 = vmatpush.msra.mxu0 0.0
    %410 = vmatpush.msra.mxu0 0.0
    %411 = vmatpush.msra.mxu0 0.0
    %412 = vmatpush.msra.mxu0 0.0
    %413 = vmatpush.msra.mxu0 0.0
    %414 = vmatpush.msra.mxu0 0.0
    %415 = vmatpush.msra.mxu0 0.0
    %416 = vmatpush.msra.mxu0 0.0
    %417 = vmatpush.msra.mxu0 0.0
    %418 = vmatpush.msra.mxu0 0.0
    %419 = vmatpush.msra.mxu0 0.0
    %420 = vmatpush.msra.mxu0 %v44
    %421 = vmatpush.msra.mxu0 %v43
    %422 = vmatpush.msra.mxu0 %v42
    %423 = vmatpush.msra.mxu0 %v41
    %424 = vmatmul.f32.gmra.mxu0 %v321
    %v425 = vpop.f32.mrf.mxu0
    %v426 = vadd.f32 0.0, %v425
    %427 = vdwg.mxu0
    %428 = vmatpush.msra.mxu0 0.0
    %429 = vmatpush.msra.mxu0 0.0
    %430 = vmatpush.msra.mxu0 0.0
    %431 = vmatpush.msra.mxu0 0.0
    %432 = vmatpush.msra.mxu0 0.0
    %433 = vmatpush.msra.mxu0 0.0
    %434 = vmatpush.msra.mxu0 0.0
    %435 = vmatpush.msra.mxu0 0.0
    %436 = vmatpush.msra.mxu0 0.0
    %437 = vmatpush.msra.mxu0 0.0
    %438 = vmatpush.msra.mxu0 0.0
    %439 = vmatpush.msra.mxu0 0.0
    %440 = vmatpush.msra.mxu0 0.0
    %441 = vmatpush.msra.mxu0 0.0
    %442 = vmatpush.msra.mxu0 0.0
    %443 = vmatpush.msra.mxu0 %v182
    %444 = vmatmul.f32.gmra.mxu0 %v344
    %v445 = vpop.f32.mrf.mxu0
    %v446 = vadd.f32 %v426, %v445
    %447 = vdwg.mxu0
    %v448 = vadd.f32 %v446, %v205
    %449 = vmatpush.msra.mxu0 0.0
    %450 = vmatpush.msra.mxu0 0.0
    %451 = vmatpush.msra.mxu0 0.0
    %452 = vmatpush.msra.mxu0 0.0
    %453 = vmatpush.msra.mxu0 0.0
    %454 = vmatpush.msra.mxu0 0.0
    %455 = vmatpush.msra.mxu0 0.0
    %456 = vmatpush.msra.mxu0 0.0
    %457 = vmatpush.msra.mxu0 0.0
    %458 = vmatpush.msra.mxu0 0.0
    %459 = vmatpush.msra.mxu0 0.0
    %460 = vmatpush.msra.mxu0 0.0
    %461 = vmatpush.msra.mxu0 %v49
    %462 = vmatpush.msra.mxu0 %v48
    %463 = vmatpush.msra.mxu0 %v47
    %464 = vmatpush.msra.mxu0 %v46
    %465 = vmatmul.f32.gmra.mxu0 %v321
    %v466 = vpop.f32.mrf.mxu0
    %v467 = vadd.f32 0.0, %v466
    %468 = vdwg.mxu0
    %469 = vmatpush.msra.mxu0 0.0
    %470 = vmatpush.msra.mxu0 0.0
    %471 = vmatpush.msra.mxu0 0.0
    %472 = vmatpush.msra.mxu0 0.0
    %473 = vmatpush.msra.mxu0 0.0
    %474 = vmatpush.msra.mxu0 0.0
    %475 = vmatpush.msra.mxu0 0.0
    %476 = vmatpush.msra.mxu0 0.0
    %477 = vmatpush.msra.mxu0 0.0
    %478 = vmatpush.msra.mxu0 0.0
    %479 = vmatpush.msra.mxu0 0.0
    %480 = vmatpush.msra.mxu0 0.0
    %481 = vmatpush.msra.mxu0 0.0
    %482 = vmatpush.msra.mxu0 0.0
    %483 = vmatpush.msra.mxu0 0.0
    %484 = vmatpush.msra.mxu0 %v229
    %485 = vmatmul.f32.gmra.mxu0 %v344
    %v486 = vpop.f32.mrf.mxu0
    %v487 = vadd.f32 %v467, %v486
    %488 = vdwg.mxu0
    %v489 = vadd.f32 %v487, %v252
    %v490 = vxor.u32 %v366, 2147483648
    %v491 = vmul.f32 %v490, 1.442695
    %v492 = vpow.pop %v491
    %v493 = vadd.f32 %v492, 1.0
    %v494 = vrcp.pop %v493
    %v495 = vmul.f32 %v493, %v494
    %v496 = vsub.f32 1.0, %v495
    %v497 = vmul.f32 %v494, %v496
    %v498 = vadd.f32 %v494, %v497
    %vm499 = vweird.f32 %v493
    %vm500 = vweird.f32 %v494
    %vm501 = vmor %vm499, %vm500
    %v502 = vsel %vm501, %v494, %v498
    %v503 = vand.u32 2147483647, %v493
    %vm504 = vcmp.eq.f32.partialorder %v503, 8.507059e+37
    %v505 = vand.u32 %v493, 2147483648
    %v506 = vor.u32 1.1754944e-38, %v505
    %v507 = vsel %vm504, %v506, %v502
    %v508 = vmul.f32 1.0, %v507
    %v509 = vxor.u32 %v407, 2147483648
    %v510 = vmul.f32 %v509, 1.442695
    %v511 = vpow.pop %v510
    %v512 = vadd.f32 %v511, 1.0
    %v513 = vrcp.pop %v512
    %v514 = vmul.f32 %v512, %v513
    %v515 = vsub.f32 1.0, %v514
    %v516 = vmul.f32 %v513, %v515
    %v517 = vadd.f32 %v513, %v516
    %vm518 = vweird.f32 %v512
    %vm519 = vweird.f32 %v513
    %vm520 = vmor %vm518, %vm519
    %v521 = vsel %vm520, %v513, %v517
    %v522 = vand.u32 2147483647, %v512
    %vm523 = vcmp.eq.f32.partialorder %v522, 8.507059e+37
    %v524 = vand.u32 %v512, 2147483648
    %v525 = vor.u32 1.1754944e-38, %v524
    %v526 = vsel %vm523, %v525, %v521
    %v527 = vmul.f32 1.0, %v526
    %v528 = vtanh.pop %v448
    %v529 = vxor.u32 %v489, 2147483648
    %v530 = vmul.f32 %v529, 1.442695
    %v531 = vpow.pop %v530
    %v532 = vadd.f32 %v531, 1.0
    %v533 = vrcp.pop %v532
    %v534 = vmul.f32 %v532, %v533
    %v535 = vsub.f32 1.0, %v534
    %v536 = vmul.f32 %v533, %v535
    %v537 = vadd.f32 %v533, %v536
    %vm538 = vweird.f32 %v532
    %vm539 = vweird.f32 %v533
    %vm540 = vmor %vm538, %vm539
    %v541 = vsel %vm540, %v533, %v537
    %v542 = vand.u32 2147483647, %v532
    %vm543 = vcmp.eq.f32.partialorder %v542, 8.507059e+37
    %v544 = vand.u32 %v532, 2147483648
    %v545 = vor.u32 1.1754944e-38, %v544
    %v546 = vsel %vm543, %v545, %v541
    %v547 = vmul.f32 1.0, %v546
    %v548 = vmul.f32 %v527, %v315
    %v549 = vmul.f32 %v508, %v528
    %v550 = vadd.f32 %v548, %v549
    %v551 = vtanh.pop %v550
    %v552 = vmul.f32 %v547, %v551
    %s553 = scalar_lea.vmem %s0, 4
    %v554 = vld [vmem:[%s553] sm:$0x3]
    %v556 = vsel %vm58, %v552, 0
    %558 = vmatpush.msra.mxu0 0.0
    %559 = vmatpush.msra.mxu0 0.0
    %560 = vmatpush.msra.mxu0 0.0
    %561 = vmatpush.msra.mxu0 0.0
    %562 = vmatpush.msra.mxu0 0.0
    %563 = vmatpush.msra.mxu0 0.0
    %564 = vmatpush.msra.mxu0 0.0
    %565 = vmatpush.msra.mxu0 0.0
    %566 = vmatpush.msra.mxu0 0.0
    %567 = vmatpush.msra.mxu0 0.0
    %568 = vmatpush.msra.mxu0 0.0
    %569 = vmatpush.msra.mxu0 0.0
    %570 = vmatpush.msra.mxu0 %v34
    %571 = vmatpush.msra.mxu0 %v33
    %572 = vmatpush.msra.mxu0 %v32
    %573 = vmatpush.msra.mxu0 %v31
    %574 = vmatmul.f32.gmra.mxu0 %v556
    %v575 = vpop.f32.mrf.mxu0
    %v576 = vadd.f32 0.0, %v575
    %577 = vdwg.mxu0
    %v579 = vsel %vm82, %v554, 0
    %581 = vmatpush.msra.mxu0 0.0
    %582 = vmatpush.msra.mxu0 0.0
    %583 = vmatpush.msra.mxu0 0.0
    %584 = vmatpush.msra.mxu0 0.0
    %585 = vmatpush.msra.mxu0 0.0
    %586 = vmatpush.msra.mxu0 0.0
    %587 = vmatpush.msra.mxu0 0.0
    %588 = vmatpush.msra.mxu0 0.0
    %589 = vmatpush.msra.mxu0 0.0
    %590 = vmatpush.msra.mxu0 0.0
    %591 = vmatpush.msra.mxu0 0.0
    %592 = vmatpush.msra.mxu0 0.0
    %593 = vmatpush.msra.mxu0 0.0
    %594 = vmatpush.msra.mxu0 0.0
    %595 = vmatpush.msra.mxu0 0.0
    %596 = vmatpush.msra.mxu0 %v88
    %597 = vmatmul.f32.gmra.mxu0 %v579
    %v598 = vpop.f32.mrf.mxu0
    %v599 = vadd.f32 %v576, %v598
    %600 = vdwg.mxu0
    %v601 = vadd.f32 %v599, %v111
    %602 = vmatpush.msra.mxu0 0.0
    %603 = vmatpush.msra.mxu0 0.0
    %604 = vmatpush.msra.mxu0 0.0
    %605 = vmatpush.msra.mxu0 0.0
    %606 = vmatpush.msra.mxu0 0.0
    %607 = vmatpush.msra.mxu0 0.0
    %608 = vmatpush.msra.mxu0 0.0
    %609 = vmatpush.msra.mxu0 0.0
    %610 = vmatpush.msra.mxu0 0.0
    %611 = vmatpush.msra.mxu0 0.0
    %612 = vmatpush.msra.mxu0 0.0
    %613 = vmatpush.msra.mxu0 0.0
    %614 = vmatpush.msra.mxu0 %v39
    %615 = vmatpush.msra.mxu0 %v38
    %616 = vmatpush.msra.mxu0 %v37
    %617 = vmatpush.msra.mxu0 %v36
    %618 = vmatmul.f32.gmra.mxu0 %v556
    %v619 = vpop.f32.mrf.mxu0
    %v620 = vadd.f32 0.0, %v619
    %621 = vdwg.mxu0
    %622 = vmatpush.msra.mxu0 0.0
    %623 = vmatpush.msra.mxu0 0.0
    %624 = vmatpush.msra.mxu0 0.0
    %625 = vmatpush.msra.mxu0 0.0
    %626 = vmatpush.msra.mxu0 0.0
    %627 = vmatpush.msra.mxu0 0.0
    %628 = vmatpush.msra.mxu0 0.0
    %629 = vmatpush.msra.mxu0 0.0
    %630 = vmatpush.msra.mxu0 0.0
    %631 = vmatpush.msra.mxu0 0.0
    %632 = vmatpush.msra.mxu0 0.0
    %633 = vmatpush.msra.mxu0 0.0
    %634 = vmatpush.msra.mxu0 0.0
    %635 = vmatpush.msra.mxu0 0.0
    %636 = vmatpush.msra.mxu0 0.0
    %637 = vmatpush.msra.mxu0 %v135
    %638 = vmatmul.f32.gmra.mxu0 %v579
    %v639 = vpop.f32.mrf.mxu0
    %v640 = vadd.f32 %v620, %v639
    %641 = vdwg.mxu0
    %v642 = vadd.f32 %v640, %v158
    %643 = vmatpush.msra.mxu0 0.0
    %644 = vmatpush.msra.mxu0 0.0
    %645 = vmatpush.msra.mxu0 0.0
    %646 = vmatpush.msra.mxu0 0.0
    %647 = vmatpush.msra.mxu0 0.0
    %648 = vmatpush.msra.mxu0 0.0
    %649 = vmatpush.msra.mxu0 0.0
    %650 = vmatpush.msra.mxu0 0.0
    %651 = vmatpush.msra.mxu0 0.0
    %652 = vmatpush.msra.mxu0 0.0
    %653 = vmatpush.msra.mxu0 0.0
    %654 = vmatpush.msra.mxu0 0.0
    %655 = vmatpush.msra.mxu0 %v44
    %656 = vmatpush.msra.mxu0 %v43
    %657 = vmatpush.msra.mxu0 %v42
    %658 = vmatpush.msra.mxu0 %v41
    %659 = vmatmul.f32.gmra.mxu0 %v556
    %v660 = vpop.f32.mrf.mxu0
    %v661 = vadd.f32 0.0, %v660
    %662 = vdwg.mxu0
    %663 = vmatpush.msra.mxu0 0.0
    %664 = vmatpush.msra.mxu0 0.0
    %665 = vmatpush.msra.mxu0 0.0
    %666 = vmatpush.msra.mxu0 0.0
    %667 = vmatpush.msra.mxu0 0.0
    %668 = vmatpush.msra.mxu0 0.0
    %669 = vmatpush.msra.mxu0 0.0
    %670 = vmatpush.msra.mxu0 0.0
    %671 = vmatpush.msra.mxu0 0.0
    %672 = vmatpush.msra.mxu0 0.0
    %673 = vmatpush.msra.mxu0 0.0
    %674 = vmatpush.msra.mxu0 0.0
    %675 = vmatpush.msra.mxu0 0.0
    %676 = vmatpush.msra.mxu0 0.0
    %677 = vmatpush.msra.mxu0 0.0
    %678 = vmatpush.msra.mxu0 %v182
    %679 = vmatmul.f32.gmra.mxu0 %v579
    %v680 = vpop.f32.mrf.mxu0
    %v681 = vadd.f32 %v661, %v680
    %682 = vdwg.mxu0
    %v683 = vadd.f32 %v681, %v205
    %684 = vmatpush.msra.mxu0 0.0
    %685 = vmatpush.msra.mxu0 0.0
    %686 = vmatpush.msra.mxu0 0.0
    %687 = vmatpush.msra.mxu0 0.0
    %688 = vmatpush.msra.mxu0 0.0
    %689 = vmatpush.msra.mxu0 0.0
    %690 = vmatpush.msra.mxu0 0.0
    %691 = vmatpush.msra.mxu0 0.0
    %692 = vmatpush.msra.mxu0 0.0
    %693 = vmatpush.msra.mxu0 0.0
    %694 = vmatpush.msra.mxu0 0.0
    %695 = vmatpush.msra.mxu0 0.0
    %696 = vmatpush.msra.mxu0 %v49
    %697 = vmatpush.msra.mxu0 %v48
    %698 = vmatpush.msra.mxu0 %v47
    %699 = vmatpush.msra.mxu0 %v46
    %700 = vmatmul.f32.gmra.mxu0 %v556
    %v701 = vpop.f32.mrf.mxu0
    %v702 = vadd.f32 0.0, %v701
    %703 = vdwg.mxu0
    %704 = vmatpush.msra.mxu0 0.0
    %705 = vmatpush.msra.mxu0 0.0
    %706 = vmatpush.msra.mxu0 0.0
    %707 = vmatpush.msra.mxu0 0.0
    %708 = vmatpush.msra.mxu0 0.0
    %709 = vmatpush.msra.mxu0 0.0
    %710 = vmatpush.msra.mxu0 0.0
    %711 = vmatpush.msra.mxu0 0.0
    %712 = vmatpush.msra.mxu0 0.0
    %713 = vmatpush.msra.mxu0 0.0
    %714 = vmatpush.msra.mxu0 0.0
    %715 = vmatpush.msra.mxu0 0.0
    %716 = vmatpush.msra.mxu0 0.0
    %717 = vmatpush.msra.mxu0 0.0
    %718 = vmatpush.msra.mxu0 0.0
    %719 = vmatpush.msra.mxu0 %v229
    %720 = vmatmul.f32.gmra.mxu0 %v579
    %v721 = vpop.f32.mrf.mxu0
    %v722 = vadd.f32 %v702, %v721
    %723 = vdwg.mxu0
    %v724 = vadd.f32 %v722, %v252
    %v725 = vxor.u32 %v601, 2147483648
    %v726 = vmul.f32 %v725, 1.442695
    %v727 = vpow.pop %v726
    %v728 = vadd.f32 %v727, 1.0
    %v729 = vrcp.pop %v728
    %v730 = vmul.f32 %v728, %v729
    %v731 = vsub.f32 1.0, %v730
    %v732 = vmul.f32 %v729, %v731
    %v733 = vadd.f32 %v729, %v732
    %vm734 = vweird.f32 %v728
    %vm735 = vweird.f32 %v729
    %vm736 = vmor %vm734, %vm735
    %v737 = vsel %vm736, %v729, %v733
    %v738 = vand.u32 2147483647, %v728
    %vm739 = vcmp.eq.f32.partialorder %v738, 8.507059e+37
    %v740 = vand.u32 %v728, 2147483648
    %v741 = vor.u32 1.1754944e-38, %v740
    %v742 = vsel %vm739, %v741, %v737
    %v743 = vmul.f32 1.0, %v742
    %v744 = vxor.u32 %v642, 2147483648
    %v745 = vmul.f32 %v744, 1.442695
    %v746 = vpow.pop %v745
    %v747 = vadd.f32 %v746, 1.0
    %v748 = vrcp.pop %v747
    %v749 = vmul.f32 %v747, %v748
    %v750 = vsub.f32 1.0, %v749
    %v751 = vmul.f32 %v748, %v750
    %v752 = vadd.f32 %v748, %v751
    %vm753 = vweird.f32 %v747
    %vm754 = vweird.f32 %v748
    %vm755 = vmor %vm753, %vm754
    %v756 = vsel %vm755, %v748, %v752
    %v757 = vand.u32 2147483647, %v747
    %vm758 = vcmp.eq.f32.partialorder %v757, 8.507059e+37
    %v759 = vand.u32 %v747, 2147483648
    %v760 = vor.u32 1.1754944e-38, %v759
    %v761 = vsel %vm758, %v760, %v756
    %v762 = vmul.f32 1.0, %v761
    %v763 = vtanh.pop %v683
    %v764 = vxor.u32 %v724, 2147483648
    %v765 = vmul.f32 %v764, 1.442695
    %v766 = vpow.pop %v765
    %v767 = vadd.f32 %v766, 1.0
    %v768 = vrcp.pop %v767
    %v769 = vmul.f32 %v767, %v768
    %v770 = vsub.f32 1.0, %v769
    %v771 = vmul.f32 %v768, %v770
    %v772 = vadd.f32 %v768, %v771
    %vm773 = vweird.f32 %v767
    %vm774 = vweird.f32 %v768
    %vm775 = vmor %vm773, %vm774
    %v776 = vsel %vm775, %v768, %v772
    %v777 = vand.u32 2147483647, %v767
    %vm778 = vcmp.eq.f32.partialorder %v777, 8.507059e+37
    %v779 = vand.u32 %v767, 2147483648
    %v780 = vor.u32 1.1754944e-38, %v779
    %v781 = vsel %vm778, %v780, %v776
    %v782 = vmul.f32 1.0, %v781
    %v783 = vmul.f32 %v762, %v550
    %v784 = vmul.f32 %v743, %v763
    %v785 = vadd.f32 %v783, %v784
    %v786 = vtanh.pop %v785
    %v787 = vmul.f32 %v782, %v786
    %s788 = scalar_lea.vmem %s0, 6
    %v789 = vld [vmem:[%s788] sm:$0x3]
    %v791 = vsel %vm58, %v787, 0
    %793 = vmatpush.msra.mxu0 0.0
    %794 = vmatpush.msra.mxu0 0.0
    %795 = vmatpush.msra.mxu0 0.0
    %796 = vmatpush.msra.mxu0 0.0
    %797 = vmatpush.msra.mxu0 0.0
    %798 = vmatpush.msra.mxu0 0.0
    %799 = vmatpush.msra.mxu0 0.0
    %800 = vmatpush.msra.mxu0 0.0
    %801 = vmatpush.msra.mxu0 0.0
    %802 = vmatpush.msra.mxu0 0.0
    %803 = vmatpush.msra.mxu0 0.0
    %804 = vmatpush.msra.mxu0 0.0
    %805 = vmatpush.msra.mxu0 %v34
    %806 = vmatpush.msra.mxu0 %v33
    %807 = vmatpush.msra.mxu0 %v32
    %808 = vmatpush.msra.mxu0 %v31
    %809 = vmatmul.f32.gmra.mxu0 %v791
    %v810 = vpop.f32.mrf.mxu0
    %v811 = vadd.f32 0.0, %v810
    %812 = vdwg.mxu0
    %v814 = vsel %vm82, %v789, 0
    %816 = vmatpush.msra.mxu0 0.0
    %817 = vmatpush.msra.mxu0 0.0
    %818 = vmatpush.msra.mxu0 0.0
    %819 = vmatpush.msra.mxu0 0.0
    %820 = vmatpush.msra.mxu0 0.0
    %821 = vmatpush.msra.mxu0 0.0
    %822 = vmatpush.msra.mxu0 0.0
    %823 = vmatpush.msra.mxu0 0.0
    %824 = vmatpush.msra.mxu0 0.0
    %825 = vmatpush.msra.mxu0 0.0
    %826 = vmatpush.msra.mxu0 0.0
    %827 = vmatpush.msra.mxu0 0.0
    %828 = vmatpush.msra.mxu0 0.0
    %829 = vmatpush.msra.mxu0 0.0
    %830 = vmatpush.msra.mxu0 0.0
    %831 = vmatpush.msra.mxu0 %v88
    %832 = vmatmul.f32.gmra.mxu0 %v814
    %v833 = vpop.f32.mrf.mxu0
    %v834 = vadd.f32 %v811, %v833
    %835 = vdwg.mxu0
    %v836 = vadd.f32 %v834, %v111
    %837 = vmatpush.msra.mxu0 0.0
    %838 = vmatpush.msra.mxu0 0.0
    %839 = vmatpush.msra.mxu0 0.0
    %840 = vmatpush.msra.mxu0 0.0
    %841 = vmatpush.msra.mxu0 0.0
    %842 = vmatpush.msra.mxu0 0.0
    %843 = vmatpush.msra.mxu0 0.0
    %844 = vmatpush.msra.mxu0 0.0
    %845 = vmatpush.msra.mxu0 0.0
    %846 = vmatpush.msra.mxu0 0.0
    %847 = vmatpush.msra.mxu0 0.0
    %848 = vmatpush.msra.mxu0 0.0
    %849 = vmatpush.msra.mxu0 %v39
    %850 = vmatpush.msra.mxu0 %v38
    %851 = vmatpush.msra.mxu0 %v37
    %852 = vmatpush.msra.mxu0 %v36
    %853 = vmatmul.f32.gmra.mxu0 %v791
    %v854 = vpop.f32.mrf.mxu0
    %v855 = vadd.f32 0.0, %v854
    %856 = vdwg.mxu0
    %857 = vmatpush.msra.mxu0 0.0
    %858 = vmatpush.msra.mxu0 0.0
    %859 = vmatpush.msra.mxu0 0.0
    %860 = vmatpush.msra.mxu0 0.0
    %861 = vmatpush.msra.mxu0 0.0
    %862 = vmatpush.msra.mxu0 0.0
    %863 = vmatpush.msra.mxu0 0.0
    %864 = vmatpush.msra.mxu0 0.0
    %865 = vmatpush.msra.mxu0 0.0
    %866 = vmatpush.msra.mxu0 0.0
    %867 = vmatpush.msra.mxu0 0.0
    %868 = vmatpush.msra.mxu0 0.0
    %869 = vmatpush.msra.mxu0 0.0
    %870 = vmatpush.msra.mxu0 0.0
    %871 = vmatpush.msra.mxu0 0.0
    %872 = vmatpush.msra.mxu0 %v135
    %873 = vmatmul.f32.gmra.mxu0 %v814
    %v874 = vpop.f32.mrf.mxu0
    %v875 = vadd.f32 %v855, %v874
    %876 = vdwg.mxu0
    %v877 = vadd.f32 %v875, %v158
    %878 = vmatpush.msra.mxu0 0.0
    %879 = vmatpush.msra.mxu0 0.0
    %880 = vmatpush.msra.mxu0 0.0
    %881 = vmatpush.msra.mxu0 0.0
    %882 = vmatpush.msra.mxu0 0.0
    %883 = vmatpush.msra.mxu0 0.0
    %884 = vmatpush.msra.mxu0 0.0
    %885 = vmatpush.msra.mxu0 0.0
    %886 = vmatpush.msra.mxu0 0.0
    %887 = vmatpush.msra.mxu0 0.0
    %888 = vmatpush.msra.mxu0 0.0
    %889 = vmatpush.msra.mxu0 0.0
    %890 = vmatpush.msra.mxu0 %v44
    %891 = vmatpush.msra.mxu0 %v43
    %892 = vmatpush.msra.mxu0 %v42
    %893 = vmatpush.msra.mxu0 %v41
    %894 = vmatmul.f32.gmra.mxu0 %v791
    %v895 = vpop.f32.mrf.mxu0
    %v896 = vadd.f32 0.0, %v895
    %897 = vdwg.mxu0
    %898 = vmatpush.msra.mxu0 0.0
    %899 = vmatpush.msra.mxu0 0.0
    %900 = vmatpush.msra.mxu0 0.0
    %901 = vmatpush.msra.mxu0 0.0
    %902 = vmatpush.msra.mxu0 0.0
    %903 = vmatpush.msra.mxu0 0.0
    %904 = vmatpush.msra.mxu0 0.0
    %905 = vmatpush.msra.mxu0 0.0
    %906 = vmatpush.msra.mxu0 0.0
    %907 = vmatpush.msra.mxu0 0.0
    %908 = vmatpush.msra.mxu0 0.0
    %909 = vmatpush.msra.mxu0 0.0
    %910 = vmatpush.msra.mxu0 0.0
    %911 = vmatpush.msra.mxu0 0.0
    %912 = vmatpush.msra.mxu0 0.0
    %913 = vmatpush.msra.mxu0 %v182
    %914 = vmatmul.f32.gmra.mxu0 %v814
    %v915 = vpop.f32.mrf.mxu0
    %v916 = vadd.f32 %v896, %v915
    %917 = vdwg.mxu0
    %v918 = vadd.f32 %v916, %v205
    %919 = vmatpush.msra.mxu0 0.0
    %920 = vmatpush.msra.mxu0 0.0
    %921 = vmatpush.msra.mxu0 0.0
    %922 = vmatpush.msra.mxu0 0.0
    %923 = vmatpush.msra.mxu0 0.0
    %924 = vmatpush.msra.mxu0 0.0
    %925 = vmatpush.msra.mxu0 0.0
    %926 = vmatpush.msra.mxu0 0.0
    %927 = vmatpush.msra.mxu0 0.0
    %928 = vmatpush.msra.mxu0 0.0
    %929 = vmatpush.msra.mxu0 0.0
    %930 = vmatpush.msra.mxu0 0.0
    %931 = vmatpush.msra.mxu0 %v49
    %932 = vmatpush.msra.mxu0 %v48
    %933 = vmatpush.msra.mxu0 %v47
    %934 = vmatpush.msra.mxu0 %v46
    %935 = vmatmul.f32.gmra.mxu0 %v791
    %v936 = vpop.f32.mrf.mxu0
    %v937 = vadd.f32 0.0, %v936
    %938 = vdwg.mxu0
    %939 = vmatpush.msra.mxu0 0.0
    %940 = vmatpush.msra.mxu0 0.0
    %941 = vmatpush.msra.mxu0 0.0
    %942 = vmatpush.msra.mxu0 0.0
    %943 = vmatpush.msra.mxu0 0.0
    %944 = vmatpush.msra.mxu0 0.0
    %945 = vmatpush.msra.mxu0 0.0
    %946 = vmatpush.msra.mxu0 0.0
    %947 = vmatpush.msra.mxu0 0.0
    %948 = vmatpush.msra.mxu0 0.0
    %949 = vmatpush.msra.mxu0 0.0
    %950 = vmatpush.msra.mxu0 0.0
    %951 = vmatpush.msra.mxu0 0.0
    %952 = vmatpush.msra.mxu0 0.0
    %953 = vmatpush.msra.mxu0 0.0
    %954 = vmatpush.msra.mxu0 %v229
    %955 = vmatmul.f32.gmra.mxu0 %v814
    %v956 = vpop.f32.mrf.mxu0
    %v957 = vadd.f32 %v937, %v956
    %958 = vdwg.mxu0
    %v959 = vadd.f32 %v957, %v252
    %v960 = vxor.u32 %v836, 2147483648
    %v961 = vmul.f32 %v960, 1.442695
    %v962 = vpow.pop %v961
    %v963 = vadd.f32 %v962, 1.0
    %v964 = vrcp.pop %v963
    %v965 = vmul.f32 %v963, %v964
    %v966 = vsub.f32 1.0, %v965
    %v967 = vmul.f32 %v964, %v966
    %v968 = vadd.f32 %v964, %v967
    %vm969 = vweird.f32 %v963
    %vm970 = vweird.f32 %v964
    %vm971 = vmor %vm969, %vm970
    %v972 = vsel %vm971, %v964, %v968
    %v973 = vand.u32 2147483647, %v963
    %vm974 = vcmp.eq.f32.partialorder %v973, 8.507059e+37
    %v975 = vand.u32 %v963, 2147483648
    %v976 = vor.u32 1.1754944e-38, %v975
    %v977 = vsel %vm974, %v976, %v972
    %v978 = vmul.f32 1.0, %v977
    %v979 = vxor.u32 %v877, 2147483648
    %v980 = vmul.f32 %v979, 1.442695
    %v981 = vpow.pop %v980
    %v982 = vadd.f32 %v981, 1.0
    %v983 = vrcp.pop %v982
    %v984 = vmul.f32 %v982, %v983
    %v985 = vsub.f32 1.0, %v984
    %v986 = vmul.f32 %v983, %v985
    %v987 = vadd.f32 %v983, %v986
    %vm988 = vweird.f32 %v982
    %vm989 = vweird.f32 %v983
    %vm990 = vmor %vm988, %vm989
    %v991 = vsel %vm990, %v983, %v987
    %v992 = vand.u32 2147483647, %v982
    %vm993 = vcmp.eq.f32.partialorder %v992, 8.507059e+37
    %v994 = vand.u32 %v982, 2147483648
    %v995 = vor.u32 1.1754944e-38, %v994
    %v996 = vsel %vm993, %v995, %v991
    %v997 = vmul.f32 1.0, %v996
    %v998 = vtanh.pop %v918
    %v999 = vxor.u32 %v959, 2147483648
    %v1000 = vmul.f32 %v999, 1.442695
    %v1001 = vpow.pop %v1000
    %v1002 = vadd.f32 %v1001, 1.0
    %v1003 = vrcp.pop %v1002
    %v1004 = vmul.f32 %v1002, %v1003
    %v1005 = vsub.f32 1.0, %v1004
    %v1006 = vmul.f32 %v1003, %v1005
    %v1007 = vadd.f32 %v1003, %v1006
    %vm1008 = vweird.f32 %v1002
    %vm1009 = vweird.f32 %v1003
    %vm1010 = vmor %vm1008, %vm1009
    %v1011 = vsel %vm1010, %v1003, %v1007
    %v1012 = vand.u32 2147483647, %v1002
    %vm1013 = vcmp.eq.f32.partialorder %v1012, 8.507059e+37
    %v1014 = vand.u32 %v1002, 2147483648
    %v1015 = vor.u32 1.1754944e-38, %v1014
    %v1016 = vsel %vm1013, %v1015, %v1011
    %v1017 = vmul.f32 1.0, %v1016
    %v1018 = vmul.f32 %v997, %v785
    %v1019 = vmul.f32 %v978, %v998
    %v1020 = vadd.f32 %v1018, %v1019
    %v1021 = vtanh.pop %v1020
    %v1022 = vmul.f32 %v1017, %v1021
    %s1023 = scalar_lea.vmem %s0, 8
    %v1024 = vld [vmem:[%s1023] sm:$0x3]
    %v1026 = vsel %vm58, %v1022, 0
    %1028 = vmatpush.msra.mxu0 0.0
    %1029 = vmatpush.msra.mxu0 0.0
    %1030 = vmatpush.msra.mxu0 0.0
    %1031 = vmatpush.msra.mxu0 0.0
    %1032 = vmatpush.msra.mxu0 0.0
    %1033 = vmatpush.msra.mxu0 0.0
    %1034 = vmatpush.msra.mxu0 0.0
    %1035 = vmatpush.msra.mxu0 0.0
    %1036 = vmatpush.msra.mxu0 0.0
    %1037 = vmatpush.msra.mxu0 0.0
    %1038 = vmatpush.msra.mxu0 0.0
    %1039 = vmatpush.msra.mxu0 0.0
    %1040 = vmatpush.msra.mxu0 %v34
    %1041 = vmatpush.msra.mxu0 %v33
    %1042 = vmatpush.msra.mxu0 %v32
    %1043 = vmatpush.msra.mxu0 %v31
    %1044 = vmatmul.f32.gmra.mxu0 %v1026
    %v1045 = vpop.f32.mrf.mxu0
    %v1046 = vadd.f32 0.0, %v1045
    %1047 = vdwg.mxu0
    %v1049 = vsel %vm82, %v1024, 0
    %1051 = vmatpush.msra.mxu0 0.0
    %1052 = vmatpush.msra.mxu0 0.0
    %1053 = vmatpush.msra.mxu0 0.0
    %1054 = vmatpush.msra.mxu0 0.0
    %1055 = vmatpush.msra.mxu0 0.0
    %1056 = vmatpush.msra.mxu0 0.0
    %1057 = vmatpush.msra.mxu0 0.0
    %1058 = vmatpush.msra.mxu0 0.0
    %1059 = vmatpush.msra.mxu0 0.0
    %1060 = vmatpush.msra.mxu0 0.0
    %1061 = vmatpush.msra.mxu0 0.0
    %1062 = vmatpush.msra.mxu0 0.0
    %1063 = vmatpush.msra.mxu0 0.0
    %1064 = vmatpush.msra.mxu0 0.0
    %1065 = vmatpush.msra.mxu0 0.0
    %1066 = vmatpush.msra.mxu0 %v88
    %1067 = vmatmul.f32.gmra.mxu0 %v1049
    %v1068 = vpop.f32.mrf.mxu0
    %v1069 = vadd.f32 %v1046, %v1068
    %1070 = vdwg.mxu0
    %v1071 = vadd.f32 %v1069, %v111
    %1072 = vmatpush.msra.mxu0 0.0
    %1073 = vmatpush.msra.mxu0 0.0
    %1074 = vmatpush.msra.mxu0 0.0
    %1075 = vmatpush.msra.mxu0 0.0
    %1076 = vmatpush.msra.mxu0 0.0
    %1077 = vmatpush.msra.mxu0 0.0
    %1078 = vmatpush.msra.mxu0 0.0
    %1079 = vmatpush.msra.mxu0 0.0
    %1080 = vmatpush.msra.mxu0 0.0
    %1081 = vmatpush.msra.mxu0 0.0
    %1082 = vmatpush.msra.mxu0 0.0
    %1083 = vmatpush.msra.mxu0 0.0
    %1084 = vmatpush.msra.mxu0 %v39
    %1085 = vmatpush.msra.mxu0 %v38
    %1086 = vmatpush.msra.mxu0 %v37
    %1087 = vmatpush.msra.mxu0 %v36
    %1088 = vmatmul.f32.gmra.mxu0 %v1026
    %v1089 = vpop.f32.mrf.mxu0
    %v1090 = vadd.f32 0.0, %v1089
    %1091 = vdwg.mxu0
    %1092 = vmatpush.msra.mxu0 0.0
    %1093 = vmatpush.msra.mxu0 0.0
    %1094 = vmatpush.msra.mxu0 0.0
    %1095 = vmatpush.msra.mxu0 0.0
    %1096 = vmatpush.msra.mxu0 0.0
    %1097 = vmatpush.msra.mxu0 0.0
    %1098 = vmatpush.msra.mxu0 0.0
    %1099 = vmatpush.msra.mxu0 0.0
    %1100 = vmatpush.msra.mxu0 0.0
    %1101 = vmatpush.msra.mxu0 0.0
    %1102 = vmatpush.msra.mxu0 0.0
    %1103 = vmatpush.msra.mxu0 0.0
    %1104 = vmatpush.msra.mxu0 0.0
    %1105 = vmatpush.msra.mxu0 0.0
    %1106 = vmatpush.msra.mxu0 0.0
    %1107 = vmatpush.msra.mxu0 %v135
    %1108 = vmatmul.f32.gmra.mxu0 %v1049
    %v1109 = vpop.f32.mrf.mxu0
    %v1110 = vadd.f32 %v1090, %v1109
    %1111 = vdwg.mxu0
    %v1112 = vadd.f32 %v1110, %v158
    %1113 = vmatpush.msra.mxu0 0.0
    %1114 = vmatpush.msra.mxu0 0.0
    %1115 = vmatpush.msra.mxu0 0.0
    %1116 = vmatpush.msra.mxu0 0.0
    %1117 = vmatpush.msra.mxu0 0.0
    %1118 = vmatpush.msra.mxu0 0.0
    %1119 = vmatpush.msra.mxu0 0.0
    %1120 = vmatpush.msra.mxu0 0.0
    %1121 = vmatpush.msra.mxu0 0.0
    %1122 = vmatpush.msra.mxu0 0.0
    %1123 = vmatpush.msra.mxu0 0.0
    %1124 = vmatpush.msra.mxu0 0.0
    %1125 = vmatpush.msra.mxu0 %v44
    %1126 = vmatpush.msra.mxu0 %v43
    %1127 = vmatpush.msra.mxu0 %v42
    %1128 = vmatpush.msra.mxu0 %v41
    %1129 = vmatmul.f32.gmra.mxu0 %v1026
    %v1130 = vpop.f32.mrf.mxu0
    %v1131 = vadd.f32 0.0, %v1130
    %1132 = vdwg.mxu0
    %1133 = vmatpush.msra.mxu0 0.0
    %1134 = vmatpush.msra.mxu0 0.0
    %1135 = vmatpush.msra.mxu0 0.0
    %1136 = vmatpush.msra.mxu0 0.0
    %1137 = vmatpush.msra.mxu0 0.0
    %1138 = vmatpush.msra.mxu0 0.0
    %1139 = vmatpush.msra.mxu0 0.0
    %1140 = vmatpush.msra.mxu0 0.0
    %1141 = vmatpush.msra.mxu0 0.0
    %1142 = vmatpush.msra.mxu0 0.0
    %1143 = vmatpush.msra.mxu0 0.0
    %1144 = vmatpush.msra.mxu0 0.0
    %1145 = vmatpush.msra.mxu0 0.0
    %1146 = vmatpush.msra.mxu0 0.0
    %1147 = vmatpush.msra.mxu0 0.0
    %1148 = vmatpush.msra.mxu0 %v182
    %1149 = vmatmul.f32.gmra.mxu0 %v1049
    %v1150 = vpop.f32.mrf.mxu0
    %v1151 = vadd.f32 %v1131, %v1150
    %1152 = vdwg.mxu0
    %v1153 = vadd.f32 %v1151, %v205
    %1154 = vmatpush.msra.mxu0 0.0
    %1155 = vmatpush.msra.mxu0 0.0
    %1156 = vmatpush.msra.mxu0 0.0
    %1157 = vmatpush.msra.mxu0 0.0
    %1158 = vmatpush.msra.mxu0 0.0
    %1159 = vmatpush.msra.mxu0 0.0
    %1160 = vmatpush.msra.mxu0 0.0
    %1161 = vmatpush.msra.mxu0 0.0
    %1162 = vmatpush.msra.mxu0 0.0
    %1163 = vmatpush.msra.mxu0 0.0
    %1164 = vmatpush.msra.mxu0 0.0
    %1165 = vmatpush.msra.mxu0 0.0
    %1166 = vmatpush.msra.mxu0 %v49
    %1167 = vmatpush.msra.mxu0 %v48
    %1168 = vmatpush.msra.mxu0 %v47
    %1169 = vmatpush.msra.mxu0 %v46
    %1170 = vmatmul.f32.gmra.mxu0 %v1026
    %v1171 = vpop.f32.mrf.mxu0
    %v1172 = vadd.f32 0.0, %v1171
    %1173 = vdwg.mxu0
    %1174 = vmatpush.msra.mxu0 0.0
    %1175 = vmatpush.msra.mxu0 0.0
    %1176 = vmatpush.msra.mxu0 0.0
    %1177 = vmatpush.msra.mxu0 0.0
    %1178 = vmatpush.msra.mxu0 0.0
    %1179 = vmatpush.msra.mxu0 0.0
    %1180 = vmatpush.msra.mxu0 0.0
    %1181 = vmatpush.msra.mxu0 0.0
    %1182 = vmatpush.msra.mxu0 0.0
    %1183 = vmatpush.msra.mxu0 0.0
    %1184 = vmatpush.msra.mxu0 0.0
    %1185 = vmatpush.msra.mxu0 0.0
    %1186 = vmatpush.msra.mxu0 0.0
    %1187 = vmatpush.msra.mxu0 0.0
    %1188 = vmatpush.msra.mxu0 0.0
    %1189 = vmatpush.msra.mxu0 %v229
    %1190 = vmatmul.f32.gmra.mxu0 %v1049
    %v1191 = vpop.f32.mrf.mxu0
    %v1192 = vadd.f32 %v1172, %v1191
    %1193 = vdwg.mxu0
    %v1194 = vadd.f32 %v1192, %v252
    %v1195 = vxor.u32 %v1071, 2147483648
    %v1196 = vmul.f32 %v1195, 1.442695
    %v1197 = vpow.pop %v1196
    %v1198 = vadd.f32 %v1197, 1.0
    %v1199 = vrcp.pop %v1198
    %v1200 = vmul.f32 %v1198, %v1199
    %v1201 = vsub.f32 1.0, %v1200
    %v1202 = vmul.f32 %v1199, %v1201
    %v1203 = vadd.f32 %v1199, %v1202
    %vm1204 = vweird.f32 %v1198
    %vm1205 = vweird.f32 %v1199
    %vm1206 = vmor %vm1204, %vm1205
    %v1207 = vsel %vm1206, %v1199, %v1203
    %v1208 = vand.u32 2147483647, %v1198
    %vm1209 = vcmp.eq.f32.partialorder %v1208, 8.507059e+37
    %v1210 = vand.u32 %v1198, 2147483648
    %v1211 = vor.u32 1.1754944e-38, %v1210
    %v1212 = vsel %vm1209, %v1211, %v1207
    %v1213 = vmul.f32 1.0, %v1212
    %v1214 = vxor.u32 %v1112, 2147483648
    %v1215 = vmul.f32 %v1214, 1.442695
    %v1216 = vpow.pop %v1215
    %v1217 = vadd.f32 %v1216, 1.0
    %v1218 = vrcp.pop %v1217
    %v1219 = vmul.f32 %v1217, %v1218
    %v1220 = vsub.f32 1.0, %v1219
    %v1221 = vmul.f32 %v1218, %v1220
    %v1222 = vadd.f32 %v1218, %v1221
    %vm1223 = vweird.f32 %v1217
    %vm1224 = vweird.f32 %v1218
    %vm1225 = vmor %vm1223, %vm1224
    %v1226 = vsel %vm1225, %v1218, %v1222
    %v1227 = vand.u32 2147483647, %v1217
    %vm1228 = vcmp.eq.f32.partialorder %v1227, 8.507059e+37
    %v1229 = vand.u32 %v1217, 2147483648
    %v1230 = vor.u32 1.1754944e-38, %v1229
    %v1231 = vsel %vm1228, %v1230, %v1226
    %v1232 = vmul.f32 1.0, %v1231
    %v1233 = vtanh.pop %v1153
    %v1234 = vxor.u32 %v1194, 2147483648
    %v1235 = vmul.f32 %v1234, 1.442695
    %v1236 = vpow.pop %v1235
    %v1237 = vadd.f32 %v1236, 1.0
    %v1238 = vrcp.pop %v1237
    %v1239 = vmul.f32 %v1237, %v1238
    %v1240 = vsub.f32 1.0, %v1239
    %v1241 = vmul.f32 %v1238, %v1240
    %v1242 = vadd.f32 %v1238, %v1241
    %vm1243 = vweird.f32 %v1237
    %vm1244 = vweird.f32 %v1238
    %vm1245 = vmor %vm1243, %vm1244
    %v1246 = vsel %vm1245, %v1238, %v1242
    %v1247 = vand.u32 2147483647, %v1237
    %vm1248 = vcmp.eq.f32.partialorder %v1247, 8.507059e+37
    %v1249 = vand.u32 %v1237, 2147483648
    %v1250 = vor.u32 1.1754944e-38, %v1249
    %v1251 = vsel %vm1248, %v1250, %v1246
    %v1252 = vmul.f32 1.0, %v1251
    %v1253 = vmul.f32 %v1232, %v1020
    %v1254 = vmul.f32 %v1213, %v1233
    %v1255 = vadd.f32 %v1253, %v1254
    %v1256 = vtanh.pop %v1255
    %v1257 = vmul.f32 %v1252, %v1256
    %s1258 = scalar_lea.vmem %s0, 10
    %v1259 = vld [vmem:[%s1258] sm:$0x3]
    %v1261 = vsel %vm58, %v1257, 0
    %1263 = vmatpush.msra.mxu0 0.0
    %1264 = vmatpush.msra.mxu0 0.0
    %1265 = vmatpush.msra.mxu0 0.0
    %1266 = vmatpush.msra.mxu0 0.0
    %1267 = vmatpush.msra.mxu0 0.0
    %1268 = vmatpush.msra.mxu0 0.0
    %1269 = vmatpush.msra.mxu0 0.0
    %1270 = vmatpush.msra.mxu0 0.0
    %1271 = vmatpush.msra.mxu0 0.0
    %1272 = vmatpush.msra.mxu0 0.0
    %1273 = vmatpush.msra.mxu0 0.0
    %1274 = vmatpush.msra.mxu0 0.0
    %1275 = vmatpush.msra.mxu0 %v34
    %1276 = vmatpush.msra.mxu0 %v33
    %1277 = vmatpush.msra.mxu0 %v32
    %1278 = vmatpush.msra.mxu0 %v31
    %1279 = vmatmul.f32.gmra.mxu0 %v1261
    %v1280 = vpop.f32.mrf.mxu0
    %v1281 = vadd.f32 0.0, %v1280
    %1282 = vdwg.mxu0
    %v1284 = vsel %vm82, %v1259, 0
    %1286 = vmatpush.msra.mxu0 0.0
    %1287 = vmatpush.msra.mxu0 0.0
    %1288 = vmatpush.msra.mxu0 0.0
    %1289 = vmatpush.msra.mxu0 0.0
    %1290 = vmatpush.msra.mxu0 0.0
    %1291 = vmatpush.msra.mxu0 0.0
    %1292 = vmatpush.msra.mxu0 0.0
    %1293 = vmatpush.msra.mxu0 0.0
    %1294 = vmatpush.msra.mxu0 0.0
    %1295 = vmatpush.msra.mxu0 0.0
    %1296 = vmatpush.msra.mxu0 0.0
    %1297 = vmatpush.msra.mxu0 0.0
    %1298 = vmatpush.msra.mxu0 0.0
    %1299 = vmatpush.msra.mxu0 0.0
    %1300 = vmatpush.msra.mxu0 0.0
    %1301 = vmatpush.msra.mxu0 %v88
    %1302 = vmatmul.f32.gmra.mxu0 %v1284
    %v1303 = vpop.f32.mrf.mxu0
    %v1304 = vadd.f32 %v1281, %v1303
    %1305 = vdwg.mxu0
    %v1306 = vadd.f32 %v1304, %v111
    %1307 = vmatpush.msra.mxu0 0.0
    %1308 = vmatpush.msra.mxu0 0.0
    %1309 = vmatpush.msra.mxu0 0.0
    %1310 = vmatpush.msra.mxu0 0.0
    %1311 = vmatpush.msra.mxu0 0.0
    %1312 = vmatpush.msra.mxu0 0.0
    %1313 = vmatpush.msra.mxu0 0.0
    %1314 = vmatpush.msra.mxu0 0.0
    %1315 = vmatpush.msra.mxu0 0.0
    %1316 = vmatpush.msra.mxu0 0.0
    %1317 = vmatpush.msra.mxu0 0.0
    %1318 = vmatpush.msra.mxu0 0.0
    %1319 = vmatpush.msra.mxu0 %v39
    %1320 = vmatpush.msra.mxu0 %v38
    %1321 = vmatpush.msra.mxu0 %v37
    %1322 = vmatpush.msra.mxu0 %v36
    %1323 = vmatmul.f32.gmra.mxu0 %v1261
    %v1324 = vpop.f32.mrf.mxu0
    %v1325 = vadd.f32 0.0, %v1324
    %1326 = vdwg.mxu0
    %1327 = vmatpush.msra.mxu0 0.0
    %1328 = vmatpush.msra.mxu0 0.0
    %1329 = vmatpush.msra.mxu0 0.0
    %1330 = vmatpush.msra.mxu0 0.0
    %1331 = vmatpush.msra.mxu0 0.0
    %1332 = vmatpush.msra.mxu0 0.0
    %1333 = vmatpush.msra.mxu0 0.0
    %1334 = vmatpush.msra.mxu0 0.0
    %1335 = vmatpush.msra.mxu0 0.0
    %1336 = vmatpush.msra.mxu0 0.0
    %1337 = vmatpush.msra.mxu0 0.0
    %1338 = vmatpush.msra.mxu0 0.0
    %1339 = vmatpush.msra.mxu0 0.0
    %1340 = vmatpush.msra.mxu0 0.0
    %1341 = vmatpush.msra.mxu0 0.0
    %1342 = vmatpush.msra.mxu0 %v135
    %1343 = vmatmul.f32.gmra.mxu0 %v1284
    %v1344 = vpop.f32.mrf.mxu0
    %v1345 = vadd.f32 %v1325, %v1344
    %1346 = vdwg.mxu0
    %v1347 = vadd.f32 %v1345, %v158
    %1348 = vmatpush.msra.mxu0 0.0
    %1349 = vmatpush.msra.mxu0 0.0
    %1350 = vmatpush.msra.mxu0 0.0
    %1351 = vmatpush.msra.mxu0 0.0
    %1352 = vmatpush.msra.mxu0 0.0
    %1353 = vmatpush.msra.mxu0 0.0
    %1354 = vmatpush.msra.mxu0 0.0
    %1355 = vmatpush.msra.mxu0 0.0
    %1356 = vmatpush.msra.mxu0 0.0
    %1357 = vmatpush.msra.mxu0 0.0
    %1358 = vmatpush.msra.mxu0 0.0
    %1359 = vmatpush.msra.mxu0 0.0
    %1360 = vmatpush.msra.mxu0 %v44
    %1361 = vmatpush.msra.mxu0 %v43
    %1362 = vmatpush.msra.mxu0 %v42
    %1363 = vmatpush.msra.mxu0 %v41
    %1364 = vmatmul.f32.gmra.mxu0 %v1261
    %v1365 = vpop.f32.mrf.mxu0
    %v1366 = vadd.f32 0.0, %v1365
    %1367 = vdwg.mxu0
    %1368 = vmatpush.msra.mxu0 0.0
    %1369 = vmatpush.msra.mxu0 0.0
    %1370 = vmatpush.msra.mxu0 0.0
    %1371 = vmatpush.msra.mxu0 0.0
    %1372 = vmatpush.msra.mxu0 0.0
    %1373 = vmatpush.msra.mxu0 0.0
    %1374 = vmatpush.msra.mxu0 0.0
    %1375 = vmatpush.msra.mxu0 0.0
    %1376 = vmatpush.msra.mxu0 0.0
    %1377 = vmatpush.msra.mxu0 0.0
    %1378 = vmatpush.msra.mxu0 0.0
    %1379 = vmatpush.msra.mxu0 0.0
    %1380 = vmatpush.msra.mxu0 0.0
    %1381 = vmatpush.msra.mxu0 0.0
    %1382 = vmatpush.msra.mxu0 0.0
    %1383 = vmatpush.msra.mxu0 %v182
    %1384 = vmatmul.f32.gmra.mxu0 %v1284
    %v1385 = vpop.f32.mrf.mxu0
    %v1386 = vadd.f32 %v1366, %v1385
    %1387 = vdwg.mxu0
    %v1388 = vadd.f32 %v1386, %v205
    %1389 = vmatpush.msra.mxu0 0.0
    %1390 = vmatpush.msra.mxu0 0.0
    %1391 = vmatpush.msra.mxu0 0.0
    %1392 = vmatpush.msra.mxu0 0.0
    %1393 = vmatpush.msra.mxu0 0.0
    %1394 = vmatpush.msra.mxu0 0.0
    %1395 = vmatpush.msra.mxu0 0.0
    %1396 = vmatpush.msra.mxu0 0.0
    %1397 = vmatpush.msra.mxu0 0.0
    %1398 = vmatpush.msra.mxu0 0.0
    %1399 = vmatpush.msra.mxu0 0.0
    %1400 = vmatpush.msra.mxu0 0.0
    %1401 = vmatpush.msra.mxu0 %v49
    %1402 = vmatpush.msra.mxu0 %v48
    %1403 = vmatpush.msra.mxu0 %v47
    %1404 = vmatpush.msra.mxu0 %v46
    %1405 = vmatmul.f32.gmra.mxu0 %v1261
    %v1406 = vpop.f32.mrf.mxu0
    %v1407 = vadd.f32 0.0, %v1406
    %1408 = vdwg.mxu0
    %1409 = vmatpush.msra.mxu0 0.0
    %1410 = vmatpush.msra.mxu0 0.0
    %1411 = vmatpush.msra.mxu0 0.0
    %1412 = vmatpush.msra.mxu0 0.0
    %1413 = vmatpush.msra.mxu0 0.0
    %1414 = vmatpush.msra.mxu0 0.0
    %1415 = vmatpush.msra.mxu0 0.0
    %1416 = vmatpush.msra.mxu0 0.0
    %1417 = vmatpush.msra.mxu0 0.0
    %1418 = vmatpush.msra.mxu0 0.0
    %1419 = vmatpush.msra.mxu0 0.0
    %1420 = vmatpush.msra.mxu0 0.0
    %1421 = vmatpush.msra.mxu0 0.0
    %1422 = vmatpush.msra.mxu0 0.0
    %1423 = vmatpush.msra.mxu0 0.0
    %1424 = vmatpush.msra.mxu0 %v229
    %1425 = vmatmul.f32.gmra.mxu0 %v1284
    %v1426 = vpop.f32.mrf.mxu0
    %v1427 = vadd.f32 %v1407, %v1426
    %1428 = vdwg.mxu0
    %v1429 = vadd.f32 %v1427, %v252
    %v1430 = vxor.u32 %v1306, 2147483648
    %v1431 = vmul.f32 %v1430, 1.442695
    %v1432 = vpow.pop %v1431
    %v1433 = vadd.f32 %v1432, 1.0
    %v1434 = vrcp.pop %v1433
    %v1435 = vmul.f32 %v1433, %v1434
    %v1436 = vsub.f32 1.0, %v1435
    %v1437 = vmul.f32 %v1434, %v1436
    %v1438 = vadd.f32 %v1434, %v1437
    %vm1439 = vweird.f32 %v1433
    %vm1440 = vweird.f32 %v1434
    %vm1441 = vmor %vm1439, %vm1440
    %v1442 = vsel %vm1441, %v1434, %v1438
    %v1443 = vand.u32 2147483647, %v1433
    %vm1444 = vcmp.eq.f32.partialorder %v1443, 8.507059e+37
    %v1445 = vand.u32 %v1433, 2147483648
    %v1446 = vor.u32 1.1754944e-38, %v1445
    %v1447 = vsel %vm1444, %v1446, %v1442
    %v1448 = vmul.f32 1.0, %v1447
    %v1449 = vxor.u32 %v1347, 2147483648
    %v1450 = vmul.f32 %v1449, 1.442695
    %v1451 = vpow.pop %v1450
    %v1452 = vadd.f32 %v1451, 1.0
    %v1453 = vrcp.pop %v1452
    %v1454 = vmul.f32 %v1452, %v1453
    %v1455 = vsub.f32 1.0, %v1454
    %v1456 = vmul.f32 %v1453, %v1455
    %v1457 = vadd.f32 %v1453, %v1456
    %vm1458 = vweird.f32 %v1452
    %vm1459 = vweird.f32 %v1453
    %vm1460 = vmor %vm1458, %vm1459
    %v1461 = vsel %vm1460, %v1453, %v1457
    %v1462 = vand.u32 2147483647, %v1452
    %vm1463 = vcmp.eq.f32.partialorder %v1462, 8.507059e+37
    %v1464 = vand.u32 %v1452, 2147483648
    %v1465 = vor.u32 1.1754944e-38, %v1464
    %v1466 = vsel %vm1463, %v1465, %v1461
    %v1467 = vmul.f32 1.0, %v1466
    %v1468 = vtanh.pop %v1388
    %v1469 = vxor.u32 %v1429, 2147483648
    %v1470 = vmul.f32 %v1469, 1.442695
    %v1471 = vpow.pop %v1470
    %v1472 = vadd.f32 %v1471, 1.0
    %v1473 = vrcp.pop %v1472
    %v1474 = vmul.f32 %v1472, %v1473
    %v1475 = vsub.f32 1.0, %v1474
    %v1476 = vmul.f32 %v1473, %v1475
    %v1477 = vadd.f32 %v1473, %v1476
    %vm1478 = vweird.f32 %v1472
    %vm1479 = vweird.f32 %v1473
    %vm1480 = vmor %vm1478, %vm1479
    %v1481 = vsel %vm1480, %v1473, %v1477
    %v1482 = vand.u32 2147483647, %v1472
    %vm1483 = vcmp.eq.f32.partialorder %v1482, 8.507059e+37
    %v1484 = vand.u32 %v1472, 2147483648
    %v1485 = vor.u32 1.1754944e-38, %v1484
    %v1486 = vsel %vm1483, %v1485, %v1481
    %v1487 = vmul.f32 1.0, %v1486
    %v1488 = vmul.f32 %v1467, %v1255
    %v1489 = vmul.f32 %v1448, %v1468
    %v1490 = vadd.f32 %v1488, %v1489
    %v1491 = vtanh.pop %v1490
    %v1492 = vmul.f32 %v1487, %v1491
    %s1493 = scalar_lea.vmem %s0, 12
    %v1494 = vld [vmem:[%s1493] sm:$0x3]
    %v1496 = vsel %vm58, %v1492, 0
    %1498 = vmatpush.msra.mxu0 0.0
    %1499 = vmatpush.msra.mxu0 0.0
    %1500 = vmatpush.msra.mxu0 0.0
    %1501 = vmatpush.msra.mxu0 0.0
    %1502 = vmatpush.msra.mxu0 0.0
    %1503 = vmatpush.msra.mxu0 0.0
    %1504 = vmatpush.msra.mxu0 0.0
    %1505 = vmatpush.msra.mxu0 0.0
    %1506 = vmatpush.msra.mxu0 0.0
    %1507 = vmatpush.msra.mxu0 0.0
    %1508 = vmatpush.msra.mxu0 0.0
    %1509 = vmatpush.msra.mxu0 0.0
    %1510 = vmatpush.msra.mxu0 %v34
    %1511 = vmatpush.msra.mxu0 %v33
    %1512 = vmatpush.msra.mxu0 %v32
    %1513 = vmatpush.msra.mxu0 %v31
    %1514 = vmatmul.f32.gmra.mxu0 %v1496
    %v1515 = vpop.f32.mrf.mxu0
    %v1516 = vadd.f32 0.0, %v1515
    %1517 = vdwg.mxu0
    %v1519 = vsel %vm82, %v1494, 0
    %1521 = vmatpush.msra.mxu0 0.0
    %1522 = vmatpush.msra.mxu0 0.0
    %1523 = vmatpush.msra.mxu0 0.0
    %1524 = vmatpush.msra.mxu0 0.0
    %1525 = vmatpush.msra.mxu0 0.0
    %1526 = vmatpush.msra.mxu0 0.0
    %1527 = vmatpush.msra.mxu0 0.0
    %1528 = vmatpush.msra.mxu0 0.0
    %1529 = vmatpush.msra.mxu0 0.0
    %1530 = vmatpush.msra.mxu0 0.0
    %1531 = vmatpush.msra.mxu0 0.0
    %1532 = vmatpush.msra.mxu0 0.0
    %1533 = vmatpush.msra.mxu0 0.0
    %1534 = vmatpush.msra.mxu0 0.0
    %1535 = vmatpush.msra.mxu0 0.0
    %1536 = vmatpush.msra.mxu0 %v88
    %1537 = vmatmul.f32.gmra.mxu0 %v1519
    %v1538 = vpop.f32.mrf.mxu0
    %v1539 = vadd.f32 %v1516, %v1538
    %1540 = vdwg.mxu0
    %v1541 = vadd.f32 %v1539, %v111
    %1542 = vmatpush.msra.mxu0 0.0
    %1543 = vmatpush.msra.mxu0 0.0
    %1544 = vmatpush.msra.mxu0 0.0
    %1545 = vmatpush.msra.mxu0 0.0
    %1546 = vmatpush.msra.mxu0 0.0
    %1547 = vmatpush.msra.mxu0 0.0
    %1548 = vmatpush.msra.mxu0 0.0
    %1549 = vmatpush.msra.mxu0 0.0
    %1550 = vmatpush.msra.mxu0 0.0
    %1551 = vmatpush.msra.mxu0 0.0
    %1552 = vmatpush.msra.mxu0 0.0
    %1553 = vmatpush.msra.mxu0 0.0
    %1554 = vmatpush.msra.mxu0 %v39
    %1555 = vmatpush.msra.mxu0 %v38
    %1556 = vmatpush.msra.mxu0 %v37
    %1557 = vmatpush.msra.mxu0 %v36
    %1558 = vmatmul.f32.gmra.mxu0 %v1496
    %v1559 = vpop.f32.mrf.mxu0
    %v1560 = vadd.f32 0.0, %v1559
    %1561 = vdwg.mxu0
    %1562 = vmatpush.msra.mxu0 0.0
    %1563 = vmatpush.msra.mxu0 0.0
    %1564 = vmatpush.msra.mxu0 0.0
    %1565 = vmatpush.msra.mxu0 0.0
    %1566 = vmatpush.msra.mxu0 0.0
    %1567 = vmatpush.msra.mxu0 0.0
    %1568 = vmatpush.msra.mxu0 0.0
    %1569 = vmatpush.msra.mxu0 0.0
    %1570 = vmatpush.msra.mxu0 0.0
    %1571 = vmatpush.msra.mxu0 0.0
    %1572 = vmatpush.msra.mxu0 0.0
    %1573 = vmatpush.msra.mxu0 0.0
    %1574 = vmatpush.msra.mxu0 0.0
    %1575 = vmatpush.msra.mxu0 0.0
    %1576 = vmatpush.msra.mxu0 0.0
    %1577 = vmatpush.msra.mxu0 %v135
    %1578 = vmatmul.f32.gmra.mxu0 %v1519
    %v1579 = vpop.f32.mrf.mxu0
    %v1580 = vadd.f32 %v1560, %v1579
    %1581 = vdwg.mxu0
    %v1582 = vadd.f32 %v1580, %v158
    %1583 = vmatpush.msra.mxu0 0.0
    %1584 = vmatpush.msra.mxu0 0.0
    %1585 = vmatpush.msra.mxu0 0.0
    %1586 = vmatpush.msra.mxu0 0.0
    %1587 = vmatpush.msra.mxu0 0.0
    %1588 = vmatpush.msra.mxu0 0.0
    %1589 = vmatpush.msra.mxu0 0.0
    %1590 = vmatpush.msra.mxu0 0.0
    %1591 = vmatpush.msra.mxu0 0.0
    %1592 = vmatpush.msra.mxu0 0.0
    %1593 = vmatpush.msra.mxu0 0.0
    %1594 = vmatpush.msra.mxu0 0.0
    %1595 = vmatpush.msra.mxu0 %v44
    %1596 = vmatpush.msra.mxu0 %v43
    %1597 = vmatpush.msra.mxu0 %v42
    %1598 = vmatpush.msra.mxu0 %v41
    %1599 = vmatmul.f32.gmra.mxu0 %v1496
    %v1600 = vpop.f32.mrf.mxu0
    %v1601 = vadd.f32 0.0, %v1600
    %1602 = vdwg.mxu0
    %1603 = vmatpush.msra.mxu0 0.0
    %1604 = vmatpush.msra.mxu0 0.0
    %1605 = vmatpush.msra.mxu0 0.0
    %1606 = vmatpush.msra.mxu0 0.0
    %1607 = vmatpush.msra.mxu0 0.0
    %1608 = vmatpush.msra.mxu0 0.0
    %1609 = vmatpush.msra.mxu0 0.0
    %1610 = vmatpush.msra.mxu0 0.0
    %1611 = vmatpush.msra.mxu0 0.0
    %1612 = vmatpush.msra.mxu0 0.0
    %1613 = vmatpush.msra.mxu0 0.0
    %1614 = vmatpush.msra.mxu0 0.0
    %1615 = vmatpush.msra.mxu0 0.0
    %1616 = vmatpush.msra.mxu0 0.0
    %1617 = vmatpush.msra.mxu0 0.0
    %1618 = vmatpush.msra.mxu0 %v182
    %1619 = vmatmul.f32.gmra.mxu0 %v1519
    %v1620 = vpop.f32.mrf.mxu0
    %v1621 = vadd.f32 %v1601, %v1620
    %1622 = vdwg.mxu0
    %v1623 = vadd.f32 %v1621, %v205
    %1624 = vmatpush.msra.mxu0 0.0
    %1625 = vmatpush.msra.mxu0 0.0
    %1626 = vmatpush.msra.mxu0 0.0
    %1627 = vmatpush.msra.mxu0 0.0
    %1628 = vmatpush.msra.mxu0 0.0
    %1629 = vmatpush.msra.mxu0 0.0
    %1630 = vmatpush.msra.mxu0 0.0
    %1631 = vmatpush.msra.mxu0 0.0
    %1632 = vmatpush.msra.mxu0 0.0
    %1633 = vmatpush.msra.mxu0 0.0
    %1634 = vmatpush.msra.mxu0 0.0
    %1635 = vmatpush.msra.mxu0 0.0
    %1636 = vmatpush.msra.mxu0 %v49
    %1637 = vmatpush.msra.mxu0 %v48
    %1638 = vmatpush.msra.mxu0 %v47
    %1639 = vmatpush.msra.mxu0 %v46
    %1640 = vmatmul.f32.gmra.mxu0 %v1496
    %v1641 = vpop.f32.mrf.mxu0
    %v1642 = vadd.f32 0.0, %v1641
    %1643 = vdwg.mxu0
    %1644 = vmatpush.msra.mxu0 0.0
    %1645 = vmatpush.msra.mxu0 0.0
    %1646 = vmatpush.msra.mxu0 0.0
    %1647 = vmatpush.msra.mxu0 0.0
    %1648 = vmatpush.msra.mxu0 0.0
    %1649 = vmatpush.msra.mxu0 0.0
    %1650 = vmatpush.msra.mxu0 0.0
    %1651 = vmatpush.msra.mxu0 0.0
    %1652 = vmatpush.msra.mxu0 0.0
    %1653 = vmatpush.msra.mxu0 0.0
    %1654 = vmatpush.msra.mxu0 0.0
    %1655 = vmatpush.msra.mxu0 0.0
    %1656 = vmatpush.msra.mxu0 0.0
    %1657 = vmatpush.msra.mxu0 0.0
    %1658 = vmatpush.msra.mxu0 0.0
    %1659 = vmatpush.msra.mxu0 %v229
    %1660 = vmatmul.f32.gmra.mxu0 %v1519
    %v1661 = vpop.f32.mrf.mxu0
    %v1662 = vadd.f32 %v1642, %v1661
    %1663 = vdwg.mxu0
    %v1664 = vadd.f32 %v1662, %v252
    %v1665 = vxor.u32 %v1541, 2147483648
    %v1666 = vmul.f32 %v1665, 1.442695
    %v1667 = vpow.pop %v1666
    %v1668 = vadd.f32 %v1667, 1.0
    %v1669 = vrcp.pop %v1668
    %v1670 = vmul.f32 %v1668, %v1669
    %v1671 = vsub.f32 1.0, %v1670
    %v1672 = vmul.f32 %v1669, %v1671
    %v1673 = vadd.f32 %v1669, %v1672
    %vm1674 = vweird.f32 %v1668
    %vm1675 = vweird.f32 %v1669
    %vm1676 = vmor %vm1674, %vm1675
    %v1677 = vsel %vm1676, %v1669, %v1673
    %v1678 = vand.u32 2147483647, %v1668
    %vm1679 = vcmp.eq.f32.partialorder %v1678, 8.507059e+37
    %v1680 = vand.u32 %v1668, 2147483648
    %v1681 = vor.u32 1.1754944e-38, %v1680
    %v1682 = vsel %vm1679, %v1681, %v1677
    %v1683 = vmul.f32 1.0, %v1682
    %v1684 = vxor.u32 %v1582, 2147483648
    %v1685 = vmul.f32 %v1684, 1.442695
    %v1686 = vpow.pop %v1685
    %v1687 = vadd.f32 %v1686, 1.0
    %v1688 = vrcp.pop %v1687
    %v1689 = vmul.f32 %v1687, %v1688
    %v1690 = vsub.f32 1.0, %v1689
    %v1691 = vmul.f32 %v1688, %v1690
    %v1692 = vadd.f32 %v1688, %v1691
    %vm1693 = vweird.f32 %v1687
    %vm1694 = vweird.f32 %v1688
    %vm1695 = vmor %vm1693, %vm1694
    %v1696 = vsel %vm1695, %v1688, %v1692
    %v1697 = vand.u32 2147483647, %v1687
    %vm1698 = vcmp.eq.f32.partialorder %v1697, 8.507059e+37
    %v1699 = vand.u32 %v1687, 2147483648
    %v1700 = vor.u32 1.1754944e-38, %v1699
    %v1701 = vsel %vm1698, %v1700, %v1696
    %v1702 = vmul.f32 1.0, %v1701
    %v1703 = vtanh.pop %v1623
    %v1704 = vxor.u32 %v1664, 2147483648
    %v1705 = vmul.f32 %v1704, 1.442695
    %v1706 = vpow.pop %v1705
    %v1707 = vadd.f32 %v1706, 1.0
    %v1708 = vrcp.pop %v1707
    %v1709 = vmul.f32 %v1707, %v1708
    %v1710 = vsub.f32 1.0, %v1709
    %v1711 = vmul.f32 %v1708, %v1710
    %v1712 = vadd.f32 %v1708, %v1711
    %vm1713 = vweird.f32 %v1707
    %vm1714 = vweird.f32 %v1708
    %vm1715 = vmor %vm1713, %vm1714
    %v1716 = vsel %vm1715, %v1708, %v1712
    %v1717 = vand.u32 2147483647, %v1707
    %vm1718 = vcmp.eq.f32.partialorder %v1717, 8.507059e+37
    %v1719 = vand.u32 %v1707, 2147483648
    %v1720 = vor.u32 1.1754944e-38, %v1719
    %v1721 = vsel %vm1718, %v1720, %v1716
    %v1722 = vmul.f32 1.0, %v1721
    %v1723 = vmul.f32 %v1702, %v1490
    %v1724 = vmul.f32 %v1683, %v1703
    %v1725 = vadd.f32 %v1723, %v1724
    %v1726 = vtanh.pop %v1725
    %v1727 = vmul.f32 %v1722, %v1726
    %s1728 = scalar_lea.vmem %s0, 14
    %v1729 = vld [vmem:[%s1728] sm:$0x3]
    %v1731 = vsel %vm58, %v1727, 0
    %1733 = vmatpush.msra.mxu0 0.0
    %1734 = vmatpush.msra.mxu0 0.0
    %1735 = vmatpush.msra.mxu0 0.0
    %1736 = vmatpush.msra.mxu0 0.0
    %1737 = vmatpush.msra.mxu0 0.0
    %1738 = vmatpush.msra.mxu0 0.0
    %1739 = vmatpush.msra.mxu0 0.0
    %1740 = vmatpush.msra.mxu0 0.0
    %1741 = vmatpush.msra.mxu0 0.0
    %1742 = vmatpush.msra.mxu0 0.0
    %1743 = vmatpush.msra.mxu0 0.0
    %1744 = vmatpush.msra.mxu0 0.0
    %1745 = vmatpush.msra.mxu0 %v34
    %1746 = vmatpush.msra.mxu0 %v33
    %1747 = vmatpush.msra.mxu0 %v32
    %1748 = vmatpush.msra.mxu0 %v31
    %1749 = vmatmul.f32.gmra.mxu0 %v1731
    %v1750 = vpop.f32.mrf.mxu0
    %v1751 = vadd.f32 0.0, %v1750
    %1752 = vdwg.mxu0
    %v1754 = vsel %vm82, %v1729, 0
    %1756 = vmatpush.msra.mxu0 0.0
    %1757 = vmatpush.msra.mxu0 0.0
    %1758 = vmatpush.msra.mxu0 0.0
    %1759 = vmatpush.msra.mxu0 0.0
    %1760 = vmatpush.msra.mxu0 0.0
    %1761 = vmatpush.msra.mxu0 0.0
    %1762 = vmatpush.msra.mxu0 0.0
    %1763 = vmatpush.msra.mxu0 0.0
    %1764 = vmatpush.msra.mxu0 0.0
    %1765 = vmatpush.msra.mxu0 0.0
    %1766 = vmatpush.msra.mxu0 0.0
    %1767 = vmatpush.msra.mxu0 0.0
    %1768 = vmatpush.msra.mxu0 0.0
    %1769 = vmatpush.msra.mxu0 0.0
    %1770 = vmatpush.msra.mxu0 0.0
    %1771 = vmatpush.msra.mxu0 %v88
    %1772 = vmatmul.f32.gmra.mxu0 %v1754
    %v1773 = vpop.f32.mrf.mxu0
    %v1774 = vadd.f32 %v1751, %v1773
    %1775 = vdwg.mxu0
    %v1776 = vadd.f32 %v1774, %v111
    %1777 = vmatpush.msra.mxu0 0.0
    %1778 = vmatpush.msra.mxu0 0.0
    %1779 = vmatpush.msra.mxu0 0.0
    %1780 = vmatpush.msra.mxu0 0.0
    %1781 = vmatpush.msra.mxu0 0.0
    %1782 = vmatpush.msra.mxu0 0.0
    %1783 = vmatpush.msra.mxu0 0.0
    %1784 = vmatpush.msra.mxu0 0.0
    %1785 = vmatpush.msra.mxu0 0.0
    %1786 = vmatpush.msra.mxu0 0.0
    %1787 = vmatpush.msra.mxu0 0.0
    %1788 = vmatpush.msra.mxu0 0.0
    %1789 = vmatpush.msra.mxu0 %v39
    %1790 = vmatpush.msra.mxu0 %v38
    %1791 = vmatpush.msra.mxu0 %v37
    %1792 = vmatpush.msra.mxu0 %v36
    %1793 = vmatmul.f32.gmra.mxu0 %v1731
    %v1794 = vpop.f32.mrf.mxu0
    %v1795 = vadd.f32 0.0, %v1794
    %1796 = vdwg.mxu0
    %1797 = vmatpush.msra.mxu0 0.0
    %1798 = vmatpush.msra.mxu0 0.0
    %1799 = vmatpush.msra.mxu0 0.0
    %1800 = vmatpush.msra.mxu0 0.0
    %1801 = vmatpush.msra.mxu0 0.0
    %1802 = vmatpush.msra.mxu0 0.0
    %1803 = vmatpush.msra.mxu0 0.0
    %1804 = vmatpush.msra.mxu0 0.0
    %1805 = vmatpush.msra.mxu0 0.0
    %1806 = vmatpush.msra.mxu0 0.0
    %1807 = vmatpush.msra.mxu0 0.0
    %1808 = vmatpush.msra.mxu0 0.0
    %1809 = vmatpush.msra.mxu0 0.0
    %1810 = vmatpush.msra.mxu0 0.0
    %1811 = vmatpush.msra.mxu0 0.0
    %1812 = vmatpush.msra.mxu0 %v135
    %1813 = vmatmul.f32.gmra.mxu0 %v1754
    %v1814 = vpop.f32.mrf.mxu0
    %v1815 = vadd.f32 %v1795, %v1814
    %1816 = vdwg.mxu0
    %v1817 = vadd.f32 %v1815, %v158
    %1818 = vmatpush.msra.mxu0 0.0
    %1819 = vmatpush.msra.mxu0 0.0
    %1820 = vmatpush.msra.mxu0 0.0
    %1821 = vmatpush.msra.mxu0 0.0
    %1822 = vmatpush.msra.mxu0 0.0
    %1823 = vmatpush.msra.mxu0 0.0
    %1824 = vmatpush.msra.mxu0 0.0
    %1825 = vmatpush.msra.mxu0 0.0
    %1826 = vmatpush.msra.mxu0 0.0
    %1827 = vmatpush.msra.mxu0 0.0
    %1828 = vmatpush.msra.mxu0 0.0
    %1829 = vmatpush.msra.mxu0 0.0
    %1830 = vmatpush.msra.mxu0 %v44
    %1831 = vmatpush.msra.mxu0 %v43
    %1832 = vmatpush.msra.mxu0 %v42
    %1833 = vmatpush.msra.mxu0 %v41
    %1834 = vmatmul.f32.gmra.mxu0 %v1731
    %v1835 = vpop.f32.mrf.mxu0
    %v1836 = vadd.f32 0.0, %v1835
    %1837 = vdwg.mxu0
    %1838 = vmatpush.msra.mxu0 0.0
    %1839 = vmatpush.msra.mxu0 0.0
    %1840 = vmatpush.msra.mxu0 0.0
    %1841 = vmatpush.msra.mxu0 0.0
    %1842 = vmatpush.msra.mxu0 0.0
    %1843 = vmatpush.msra.mxu0 0.0
    %1844 = vmatpush.msra.mxu0 0.0
    %1845 = vmatpush.msra.mxu0 0.0
    %1846 = vmatpush.msra.mxu0 0.0
    %1847 = vmatpush.msra.mxu0 0.0
    %1848 = vmatpush.msra.mxu0 0.0
    %1849 = vmatpush.msra.mxu0 0.0
    %1850 = vmatpush.msra.mxu0 0.0
    %1851 = vmatpush.msra.mxu0 0.0
    %1852 = vmatpush.msra.mxu0 0.0
    %1853 = vmatpush.msra.mxu0 %v182
    %1854 = vmatmul.f32.gmra.mxu0 %v1754
    %v1855 = vpop.f32.mrf.mxu0
    %v1856 = vadd.f32 %v1836, %v1855
    %1857 = vdwg.mxu0
    %v1858 = vadd.f32 %v1856, %v205
    %1859 = vmatpush.msra.mxu0 0.0
    %1860 = vmatpush.msra.mxu0 0.0
    %1861 = vmatpush.msra.mxu0 0.0
    %1862 = vmatpush.msra.mxu0 0.0
    %1863 = vmatpush.msra.mxu0 0.0
    %1864 = vmatpush.msra.mxu0 0.0
    %1865 = vmatpush.msra.mxu0 0.0
    %1866 = vmatpush.msra.mxu0 0.0
    %1867 = vmatpush.msra.mxu0 0.0
    %1868 = vmatpush.msra.mxu0 0.0
    %1869 = vmatpush.msra.mxu0 0.0
    %1870 = vmatpush.msra.mxu0 0.0
    %1871 = vmatpush.msra.mxu0 %v49
    %1872 = vmatpush.msra.mxu0 %v48
    %1873 = vmatpush.msra.mxu0 %v47
    %1874 = vmatpush.msra.mxu0 %v46
    %1875 = vmatmul.f32.gmra.mxu0 %v1731
    %v1876 = vpop.f32.mrf.mxu0
    %v1877 = vadd.f32 0.0, %v1876
    %1878 = vdwg.mxu0
    %1879 = vmatpush.msra.mxu0 0.0
    %1880 = vmatpush.msra.mxu0 0.0
    %1881 = vmatpush.msra.mxu0 0.0
    %1882 = vmatpush.msra.mxu0 0.0
    %1883 = vmatpush.msra.mxu0 0.0
    %1884 = vmatpush.msra.mxu0 0.0
    %1885 = vmatpush.msra.mxu0 0.0
    %1886 = vmatpush.msra.mxu0 0.0
    %1887 = vmatpush.msra.mxu0 0.0
    %1888 = vmatpush.msra.mxu0 0.0
    %1889 = vmatpush.msra.mxu0 0.0
    %1890 = vmatpush.msra.mxu0 0.0
    %1891 = vmatpush.msra.mxu0 0.0
    %1892 = vmatpush.msra.mxu0 0.0
    %1893 = vmatpush.msra.mxu0 0.0
    %1894 = vmatpush.msra.mxu0 %v229
    %1895 = vmatmul.f32.gmra.mxu0 %v1754
    %v1896 = vpop.f32.mrf.mxu0
    %v1897 = vadd.f32 %v1877, %v1896
    %1898 = vdwg.mxu0
    %v1899 = vadd.f32 %v1897, %v252
    %v1900 = vxor.u32 %v1776, 2147483648
    %v1901 = vmul.f32 %v1900, 1.442695
    %v1902 = vpow.pop %v1901
    %v1903 = vadd.f32 %v1902, 1.0
    %v1904 = vrcp.pop %v1903
    %v1905 = vmul.f32 %v1903, %v1904
    %v1906 = vsub.f32 1.0, %v1905
    %v1907 = vmul.f32 %v1904, %v1906
    %v1908 = vadd.f32 %v1904, %v1907
    %vm1909 = vweird.f32 %v1903
    %vm1910 = vweird.f32 %v1904
    %vm1911 = vmor %vm1909, %vm1910
    %v1912 = vsel %vm1911, %v1904, %v1908
    %v1913 = vand.u32 2147483647, %v1903
    %vm1914 = vcmp.eq.f32.partialorder %v1913, 8.507059e+37
    %v1915 = vand.u32 %v1903, 2147483648
    %v1916 = vor.u32 1.1754944e-38, %v1915
    %v1917 = vsel %vm1914, %v1916, %v1912
    %v1918 = vmul.f32 1.0, %v1917
    %v1919 = vxor.u32 %v1817, 2147483648
    %v1920 = vmul.f32 %v1919, 1.442695
    %v1921 = vpow.pop %v1920
    %v1922 = vadd.f32 %v1921, 1.0
    %v1923 = vrcp.pop %v1922
    %v1924 = vmul.f32 %v1922, %v1923
    %v1925 = vsub.f32 1.0, %v1924
    %v1926 = vmul.f32 %v1923, %v1925
    %v1927 = vadd.f32 %v1923, %v1926
    %vm1928 = vweird.f32 %v1922
    %vm1929 = vweird.f32 %v1923
    %vm1930 = vmor %vm1928, %vm1929
    %v1931 = vsel %vm1930, %v1923, %v1927
    %v1932 = vand.u32 2147483647, %v1922
    %vm1933 = vcmp.eq.f32.partialorder %v1932, 8.507059e+37
    %v1934 = vand.u32 %v1922, 2147483648
    %v1935 = vor.u32 1.1754944e-38, %v1934
    %v1936 = vsel %vm1933, %v1935, %v1931
    %v1937 = vmul.f32 1.0, %v1936
    %v1938 = vtanh.pop %v1858
    %v1939 = vxor.u32 %v1899, 2147483648
    %v1940 = vmul.f32 %v1939, 1.442695
    %v1941 = vpow.pop %v1940
    %v1942 = vadd.f32 %v1941, 1.0
    %v1943 = vrcp.pop %v1942
    %v1944 = vmul.f32 %v1942, %v1943
    %v1945 = vsub.f32 1.0, %v1944
    %v1946 = vmul.f32 %v1943, %v1945
    %v1947 = vadd.f32 %v1943, %v1946
    %vm1948 = vweird.f32 %v1942
    %vm1949 = vweird.f32 %v1943
    %vm1950 = vmor %vm1948, %vm1949
    %v1951 = vsel %vm1950, %v1943, %v1947
    %v1952 = vand.u32 2147483647, %v1942
    %vm1953 = vcmp.eq.f32.partialorder %v1952, 8.507059e+37
    %v1954 = vand.u32 %v1942, 2147483648
    %v1955 = vor.u32 1.1754944e-38, %v1954
    %v1956 = vsel %vm1953, %v1955, %v1951
    %v1957 = vmul.f32 1.0, %v1956
    %v1958 = vmul.f32 %v1937, %v1725
    %v1959 = vmul.f32 %v1918, %v1938
    %v1960 = vadd.f32 %v1958, %v1959
    %v1961 = vtanh.pop %v1960
    %v1962 = vmul.f32 %v1957, %v1961
    %v1963 = vld [vmem:[%s4] sm:$0xff]
    %v1964 = vld [vmem:[%s4 + $0x8] sm:$0xff]
    %v1965 = vld [vmem:[%s4 + $0x10] sm:$0xff]
    %v1966 = vld [vmem:[%s4 + $0x18] sm:$0xff]
    %v1967 = vld [vmem:[%s5] sm:$0x1]
    %v1969 = vperm.slane %v1967, 0
    %v1972 = vsel %vm58, %v1962, 0
    %1974 = vmatpush.msra.mxu0 0.0
    %1975 = vmatpush.msra.mxu0 0.0
    %1976 = vmatpush.msra.mxu0 0.0
    %1977 = vmatpush.msra.mxu0 0.0
    %1978 = vmatpush.msra.mxu0 0.0
    %1979 = vmatpush.msra.mxu0 0.0
    %1980 = vmatpush.msra.mxu0 0.0
    %1981 = vmatpush.msra.mxu0 0.0
    %1982 = vmatpush.msra.mxu0 0.0
    %1983 = vmatpush.msra.mxu0 0.0
    %1984 = vmatpush.msra.mxu0 0.0
    %1985 = vmatpush.msra.mxu0 0.0
    %1986 = vmatpush.msra.mxu0 %v1966
    %1987 = vmatpush.msra.mxu0 %v1965
    %1988 = vmatpush.msra.mxu0 %v1964
    %1989 = vmatpush.msra.mxu0 %v1963
    %1990 = vmatmul.f32.gmra.mxu0 %v1972
    %v1991 = vpop.f32.mrf.mxu0
    %v1992 = vadd.f32 %v1969, %v1991
    %1993 = vdwg.mxu0
    %vm1994 = vcmask 25600
    %1995 = vst.msk [vmem:[#allocation2] sm:$0x3] %vm1994, %v1992
    // Predicated region
    $region26: #{taxi_driver_lstm.1} parent=1 // pred_check
      _
    $region27: #{taxi_driver_lstm.1} parent=1 // pred_check_branch
      %1997 = sbr.rel (0) target = $region29
    $region28: #{taxi_driver_lstm.1} parent=1 // pred_region
      %1999 = vsyncadd [#allocation3], 0
      %s2001 = sshll.u32 [#allocation2], 4
      %s2002 = int_to_ptr.vmem [resolvable:$true] %s2001
      %s2003 = sshll.u32 %s6, 4
      %s2004 = int_to_ptr.hbm [resolvable:$true] %s2003
      %2006 = dma.vmem_to_hbm [thread:$0]  %s2002, 32, %s2004, [#allocation3]
    $region29: #{taxi_driver_lstm.1} parent=1 // pred_fallthru
      _
    // Predicated region
    $region30: #{taxi_driver_lstm.1} parent=1 // pred_check
      _
    $region31: #{taxi_driver_lstm.1} parent=1 // pred_check_branch
      %2008 = sbr.rel (0) target = $region33
    $region32: #{taxi_driver_lstm.1} parent=1 // pred_region
      %2010 = dma.done [#allocation3], 32
    $region33: #{taxi_driver_lstm.1} parent=1 // pred_fallthru
      _
    %2011 = vsyncpa [#allocation3], 1

</llo_original>
